<compile_context>
chip_gen: v5e
topology: v5e:2x2
jax: 0.10.0
libtpu: 0.0.40
codegen_flags: <defaults>
</compile_context>

<pallas_src>
import math
import numpy as np

import jax
import jax.numpy as jnp
from jax import lax
from jax.experimental import pallas as pl
from jax.experimental.pallas import tpu as pltpu

# ----------------------- small, test-sized ModelArgs -------------------------
VOCAB = 64
HIDDEN = 32
N_HEADS = 4
HEAD_DIM = HIDDEN // N_HEADS          # 8
INTERMEDIATE = 64
N_BLOCKS = 2
EPS = 1e-5

BATCH = 2
SEQ = 8
VOCAB_PAD = 128                       # lane-dense LM-head / output store
NEG_INF = -1e30                       # finite mask bias (no inf-inf NaNs)


# =============================== Pallas kernel ===============================

def _fused_forward_kernel(ids_ref, emb_ref, cos_ref, sin_ref,
                          wqkv_ref, wo_ref, w13_ref, w2_ref, lm_ref, out_ref):
    """Full Transformer forward for one sequence (one grid step = one batch row)."""
    S, H, I, HD, NH = SEQ, HIDDEN, INTERMEDIATE, HEAD_DIM, N_HEADS

    # ---- token embedding: lane-major ids, transposed one-hot matmul ----
    ids = ids_ref[...].reshape(1, S)                                        # (1, S) int32
    onehot_t = (lax.broadcasted_iota(jnp.int32, (VOCAB, S), 0) == ids
                ).astype(jnp.float32)                                       # (V, S)
    x = lax.dot_general(onehot_t, emb_ref[...], (((0,), (0,)), ((), ())),
                        preferred_element_type=jnp.float32)                 # (S, H)

    cos = cos_ref[...]                                                      # (S, HD)
    sin = sin_ref[...]                                                      # (S, HD)

    # ---- additive causal bias, built once and reused by every layer ----
    row = lax.broadcasted_iota(jnp.int32, (S, S), 0)
    col = lax.broadcasted_iota(jnp.int32, (S, S), 1)
    bias = jnp.where(col <= row, 0.0, NEG_INF).astype(jnp.float32)          # (S, S)

    bm = (((2,), (1,)), ((0,), (0,)))   # canonical leading-batch matmul dims
    nt = (((2,), (2,)), ((0,), (0,)))   # leading-batch, contract last dim of both

    # ---- static unroll over layers: weights stay resident in VMEM ----
    for l in range(N_BLOCKS):
        # attention RMSNorm (gain + 1/sqrt(HD) folded into wqkv host-side)
        xh = x * lax.rsqrt(jnp.mean(x * x, axis=-1, keepdims=True) + EPS)   # (S, H)
        xb = jnp.broadcast_to(xh[None], (NH, S, H))                         # (NH, S, H)

        # head-major fused projection; per-head columns = [q | q@R | k | k@R | v]
        qkv = lax.dot_general(xb, wqkv_ref[l], bm,
                              preferred_element_type=jnp.float32)           # (NH, S, 5*HD)
        # folded RoPE: q*cos + (q@R)*sin  -- pure VPU work, no extra MXU ops
        q = qkv[..., 0 * HD:1 * HD] * cos + qkv[..., 1 * HD:2 * HD] * sin   # (NH, S, HD)
        k = qkv[..., 2 * HD:3 * HD] * cos + qkv[..., 3 * HD:4 * HD] * sin
        v = qkv[..., 4 * HD:5 * HD]

        # causal attention: leading-batch dots, additive bias, EUP reciprocal softmax
        sc = lax.dot_general(q, k, nt, preferred_element_type=jnp.float32)  # (NH, S, S)
        sc = sc + bias
        sc = sc - jnp.max(sc, axis=-1, keepdims=True)
        e = jnp.exp(sc)
        p = e * pl.reciprocal(jnp.sum(e, axis=-1, keepdims=True), approx=True)
        a3 = lax.dot_general(p, v, bm, preferred_element_type=jnp.float32)  # (NH, S, HD)

        # head-contracted out-projection (no concat): per-head matmul + sum over heads
        proj = lax.dot_general(a3, wo_ref[l], bm,
                               preferred_element_type=jnp.float32)          # (NH, S, H)
        x = x + jnp.sum(proj, axis=0)                                       # residual

        # MLP RMSNorm (gain folded into w13) + fused SwiGLU; dropout = identity (eval)
        xh2 = x * lax.rsqrt(jnp.mean(x * x, axis=-1, keepdims=True) + EPS)
        gu = jnp.dot(xh2, w13_ref[l], preferred_element_type=jnp.float32)   # (S, 2I)
        g = gu[:, :I]
        u = gu[:, I:]
        x = x + jnp.dot(g * jax.nn.sigmoid(g) * u, w2_ref[l],
                        preferred_element_type=jnp.float32)

    # ---- final RMSNorm (gain folded into lm) + lane-padded LM head ----
    xh = x * lax.rsqrt(jnp.mean(x * x, axis=-1, keepdims=True) + EPS)
    out_ref[0] = jnp.dot(xh, lm_ref[...], preferred_element_type=jnp.float32)


# ============================== Python wrappers ==============================

def transformer_forward(input_ids, packed):
    """Full Transformer forward (is_start=True, is_end=True), eval mode."""
    ids3 = input_ids.reshape(BATCH, 1, SEQ).astype(jnp.int32)    # lane-major ids
    grid_spec = pltpu.PrefetchScalarGridSpec(
        num_scalar_prefetch=0,
        grid=(BATCH,),
        in_specs=[
            pl.BlockSpec((1, 1, SEQ), lambda b: (b, 0, 0)),                         # ids
            pl.BlockSpec((VOCAB, HIDDEN), lambda b: (0, 0)),                        # emb
            pl.BlockSpec((SEQ, HEAD_DIM), lambda b: (0, 0)),                        # cos
            pl.BlockSpec((SEQ, HEAD_DIM), lambda b: (0, 0)),                        # sin
            pl.BlockSpec((N_BLOCKS, N_HEADS, HIDDEN, 5 * HEAD_DIM),
                         lambda b: (0, 0, 0, 0)),                                   # wqkv slabs
            pl.BlockSpec((N_BLOCKS, N_HEADS, HEAD_DIM, HIDDEN),
                         lambda b: (0, 0, 0, 0)),                                   # wo slabs
            pl.BlockSpec((N_BLOCKS, HIDDEN, 2 * INTERMEDIATE),
                         lambda b: (0, 0, 0)),                                      # w13
            pl.BlockSpec((N_BLOCKS, INTERMEDIATE, HIDDEN),
                         lambda b: (0, 0, 0)),                                      # w2
            pl.BlockSpec((HIDDEN, VOCAB_PAD), lambda b: (0, 0)),                    # lm head
        ],
        out_specs=pl.BlockSpec((1, SEQ, VOCAB_PAD), lambda b: (b, 0, 0)),
    )
    logits_pad = pl.pallas_call(
        _fused_forward_kernel,
        out_shape=jax.ShapeDtypeStruct((BATCH, SEQ, VOCAB_PAD), jnp.float32),
        grid_spec=grid_spec,
        compiler_params=pltpu.CompilerParams(dimension_semantics=("parallel",)),
    )(ids3, packed["emb"], packed["cos"], packed["sin"],
      packed["wqkv"], packed["wo"], packed["w13"], packed["w2"], packed["lm"])
    return logits_pad[:, :, :VOCAB]


def make_rope_tables(seq_len):
    """Per-head interleaved-pair cos/sin tables + pair-rotation matrix R."""
    inv_freq = 1.0 / (10000.0 ** (np.arange(0, HEAD_DIM, 2)[: HEAD_DIM // 2] / HEAD_DIM))
    t = np.arange(seq_len, dtype=np.float32)
    ang = np.outer(t, inv_freq).astype(np.float32)            # (S, HD/2)
    cos_h = np.repeat(np.cos(ang), 2, axis=-1)                # (S, HD) interleaved
    sin_h = np.repeat(np.sin(ang), 2, axis=-1)
    # rot(x)[2j] = -x[2j+1], rot(x)[2j+1] = x[2j]  (pairs never cross head boundaries)
    R = np.zeros((HIDDEN, HIDDEN), dtype=np.float32)
    for j in range(HIDDEN // 2):
        R[2 * j + 1, 2 * j] = -1.0
        R[2 * j, 2 * j + 1] = 1.0
    return (jnp.asarray(cos_h), jnp.asarray(sin_h), jnp.asarray(R), jnp.asarray(ang))


def init_params(key):
    keys = jax.random.split(key, 2 + 6 * N_BLOCKS + 2)
    ki = iter(range(len(keys)))
    params = {}
    params["embedding"] = 0.02 * jax.random.normal(keys[next(ki)], (VOCAB, HIDDEN), jnp.float32)
    blocks = []
    for _ in range(N_BLOCKS):
        p = {
            "attn_norm": 1.0 + 0.1 * jax.random.normal(keys[next(ki)], (1, HIDDEN), jnp.float32),
            "wqkv": 0.02 * jax.random.normal(keys[next(ki)], (HIDDEN, 3 * HIDDEN), jnp.float32),
            "wo": 0.02 * jax.random.normal(keys[next(ki)], (HIDDEN, HIDDEN), jnp.float32),
            "mlp_norm": 1.0 + 0.1 * jax.random.normal(keys[next(ki)], (1, HIDDEN), jnp.float32),
            "w1": 0.02 * jax.random.normal(keys[next(ki)], (HIDDEN, INTERMEDIATE), jnp.float32),
        }
        k2, k3 = jax.random.split(keys[next(ki)])
        p["w2"] = 0.02 * jax.random.normal(k2, (INTERMEDIATE, HIDDEN), jnp.float32)
        p["w3"] = 0.02 * jax.random.normal(k3, (HIDDEN, INTERMEDIATE), jnp.float32)
        blocks.append(p)
    params["blocks"] = blocks
    params["final_norm"] = 1.0 + 0.1 * jax.random.normal(keys[next(ki)], (1, HIDDEN), jnp.float32)
    params["lm_head"] = 0.02 * jax.random.normal(keys[next(ki)], (HIDDEN, VOCAB), jnp.float32)
    return params


def pack_params(params, cos_h, sin_h, R):
    """Host-side packing: per-head weight slabs, folded RoPE rotation, folded
    RMSNorm gains and 1/sqrt(HD) score scale, fused gate/up, lane-padded LM head."""
    H, NH, HD = HIDDEN, N_HEADS, HEAD_DIM
    inv_sqrt_d = 1.0 / math.sqrt(HD)

    def per_head(W):                      # (H, NH*HD) -> (NH, H, HD) per-head column slabs
        return jnp.transpose(W.reshape(H, NH, HD), (1, 0, 2))

    wqkv, wo, w13, w2 = [], [], [], []
    for b in params["blocks"]:
        W = b["wqkv"]
        Wq, Wk, Wv = W[:, :H], W[:, H:2 * H], W[:, 2 * H:]
        an = b["attn_norm"].reshape(H, 1)                      # fold attention RMSNorm gain
        Wq_s = an * Wq * inv_sqrt_d                            # fold 1/sqrt(HD) into q columns
        Wk_s = an * Wk
        slab = jnp.concatenate(
            [per_head(Wq_s), per_head(Wq_s @ R),
             per_head(Wk_s), per_head(Wk_s @ R),
             per_head(an * Wv)], axis=-1)                       # (NH, H, 5*HD)
        wqkv.append(slab)
        wo.append(b["wo"].reshape(NH, HD, H))                   # per-head input-row slabs
        mn = b["mlp_norm"].reshape(H, 1)                        # fold MLP RMSNorm gain
        w13.append(mn * jnp.concatenate([b["w1"], b["w3"]], axis=1))   # (H, 2I)
        w2.append(b["w2"])
    lm_pad = jnp.zeros((H, VOCAB_PAD), jnp.float32).at[:, :VOCAB].set(params["lm_head"])
    lm_pad = params["final_norm"].reshape(H, 1) * lm_pad        # fold final RMSNorm gain
    return {
        "emb": params["embedding"],                 # (V, H)
        "cos": cos_h,                               # (S, HD)
        "sin": sin_h,                               # (S, HD)
        "wqkv": jnp.stack(wqkv),                    # (L, NH, H, 5*HD)
        "wo": jnp.stack(wo),                        # (L, NH, HD, H)
        "w13": jnp.stack(w13),                      # (L, H, 2I)
        "w2": jnp.stack(w2),                        # (L, I, H)
        "lm": lm_pad,                               # (H, 128)
    }


# ---------------------- plain-JAX reference (for checking) -------------------

def _ref_rmsnorm(x, w):
    var = jnp.mean(x * x, axis=-1, keepdims=True)
    return x * jax.lax.rsqrt(var + EPS) * w


def _ref_rope(z, ang):
    # z: (B, S, NH, HD); ang: (S, HD/2)  -- complex multiply on interleaved pairs
    B, S, NH, HD = z.shape
    z = z.reshape(B, S, NH, HD // 2, 2)
    ze, zo = z[..., 0], z[..., 1]
    c = jnp.cos(ang)[None, :, None, :]
    s = jnp.sin(ang)[None, :, None, :]
    re = ze * c - zo * s
    im = ze * s + zo * c
    return jnp.stack([re, im], axis=-1).reshape(B, S, NH, HD)


def ref_forward(input_ids, params, ang):
    x = jnp.take(params["embedding"], input_ids, axis=0)
    B, S, H = x.shape
    for p in params["blocks"]:
        xn = _ref_rmsnorm(x, p["attn_norm"])
        qkv = xn @ p["wqkv"]
        q, k, v = qkv[..., :H], qkv[..., H:2 * H], qkv[..., 2 * H:]
        qh = _ref_rope(q.reshape(B, S, N_HEADS, HEAD_DIM), ang)
        kh = _ref_rope(k.reshape(B, S, N_HEADS, HEAD_DIM), ang)
        vh = v.reshape(B, S, N_HEADS, HEAD_DIM)
        sc = jnp.einsum("bqhd,bkhd->bhqk", qh, kh) / math.sqrt(HEAD_DIM)
        row = jnp.arange(S)[:, None]
        col = jnp.arange(S)[None, :]
        sc = jnp.where((col <= row)[None, None], sc, -jnp.inf)
        pr = jax.nn.softmax(sc, axis=-1)
        attn = jnp.einsum("bhqk,bkhd->bqhd", pr, vh).reshape(B, S, H)
        x = x + attn @ p["wo"]
        xn2 = _ref_rmsnorm(x, p["mlp_norm"])
        x = x + (jax.nn.silu(xn2 @ p["w1"]) * (xn2 @ p["w3"])) @ p["w2"]
    x = _ref_rmsnorm(x, params["final_norm"])
    return x @ params["lm_head"]


# ==================================== main ====================================

if __name__ == "__main__":
    key = jax.random.PRNGKey(0)
    k_ids, k_params = jax.random.split(key)

    input_ids = jax.random.randint(k_ids, (BATCH, SEQ), 0, VOCAB, dtype=jnp.int32)
    params = init_params(k_params)
    cos_h, sin_h, R, ang = make_rope_tables(SEQ)
    packed = pack_params(params, cos_h, sin_h, R)

    logits = transformer_forward(input_ids, packed)
    logits = jax.block_until_ready(logits)

    # sanity check against plain-JAX reference (loose tol: MXU precision + approx rcp)
    ref = jax.block_until_ready(ref_forward(input_ids, params, ang))
    if not np.allclose(np.asarray(logits), np.asarray(ref), atol=2e-2, rtol=2e-2):
        raise AssertionError("Pallas kernel output does not match reference")

    print("KERNEL_OK")
</pallas_src>

<mosaic_0001>
module attributes {stable_mosaic.version = 11 : i64} {
  func.func @_fused_forward_kernel(%arg0: i32, %arg1: memref<1x1x8xi32, #tpu.memory_space<vmem>>, %arg2: memref<64x32xf32, #tpu.memory_space<vmem>>, %arg3: memref<8x8xf32, #tpu.memory_space<vmem>>, %arg4: memref<8x8xf32, #tpu.memory_space<vmem>>, %arg5: memref<2x4x32x40xf32, #tpu.memory_space<vmem>>, %arg6: memref<2x4x8x32xf32, #tpu.memory_space<vmem>>, %arg7: memref<2x32x128xf32, #tpu.memory_space<vmem>>, %arg8: memref<2x64x32xf32, #tpu.memory_space<vmem>>, %arg9: memref<32x128xf32, #tpu.memory_space<vmem>>, %arg10: memref<1x8x128xf32, #tpu.memory_space<vmem>>) attributes {dimension_semantics = [#tpu.dimension_semantics<parallel>], iteration_bounds = array<i64: 2>, scalar_prefetch = 0 : i64, scratch_operands = 0 : i64, tpu.core_type = #tpu.core_type<tc>, window_params = [{transform_indices = @transform_0, window_bounds = array<i64: 1, 1, 8>}, {pipeline_mode = #tpu.pipeline_mode<synchronous>, transform_indices = @transform_1, window_bounds = array<i64: 64, 32>}, {pipeline_mode = #tpu.pipeline_mode<synchronous>, transform_indices = @transform_2, window_bounds = array<i64: 8, 8>}, {pipeline_mode = #tpu.pipeline_mode<synchronous>, transform_indices = @transform_3, window_bounds = array<i64: 8, 8>}, {pipeline_mode = #tpu.pipeline_mode<synchronous>, transform_indices = @transform_4, window_bounds = array<i64: 2, 4, 32, 40>}, {pipeline_mode = #tpu.pipeline_mode<synchronous>, transform_indices = @transform_5, window_bounds = array<i64: 2, 4, 8, 32>}, {pipeline_mode = #tpu.pipeline_mode<synchronous>, transform_indices = @transform_6, window_bounds = array<i64: 2, 32, 128>}, {pipeline_mode = #tpu.pipeline_mode<synchronous>, transform_indices = @transform_7, window_bounds = array<i64: 2, 64, 32>}, {pipeline_mode = #tpu.pipeline_mode<synchronous>, transform_indices = @transform_8, window_bounds = array<i64: 32, 128>}, {transform_indices = @transform_9, window_bounds = array<i64: 1, 8, 128>}]} {
    %c0 = arith.constant 0 : index
    %c0_0 = arith.constant 0 : index
    %c0_1 = arith.constant 0 : index
    %0 = vector.load %arg1[%c0, %c0_0, %c0_1] : memref<1x1x8xi32, #tpu.memory_space<vmem>>, vector<1x1x8xi32>
    %1 = vector.shape_cast %0 : vector<1x1x8xi32> to vector<1x8xi32>
    %2 = tpu.iota {dimensions = array<i32: 0>} : vector<64x8xi32>
    %3 = vector.broadcast %1 : vector<1x8xi32> to vector<64x8xi32>
    %4 = arith.cmpi eq, %2, %3 : vector<64x8xi32>
    %5 = arith.extui %4 : vector<64x8xi1> to vector<64x8xi32>
    %6 = arith.sitofp %5 : vector<64x8xi32> to vector<64x8xf32>
    %c0_2 = arith.constant 0 : index
    %c0_3 = arith.constant 0 : index
    %7 = vector.load %arg2[%c0_2, %c0_3] : memref<64x32xf32, #tpu.memory_space<vmem>>, vector<64x32xf32>
    %cst = arith.constant dense<0.000000e+00> : vector<8x32xf32>
    %8 = tpu.matmul %6, %7, %cst {dimension_numbers = #tpu.dot_dimension_numbers<[0], [0], [1], [1], [0, 1, 1, 1], [], []>} : vector<64x8xf32>, vector<64x32xf32>, vector<8x32xf32> -> vector<8x32xf32>
    %c0_4 = arith.constant 0 : index
    %c0_5 = arith.constant 0 : index
    %9 = vector.load %arg3[%c0_4, %c0_5] : memref<8x8xf32, #tpu.memory_space<vmem>>, vector<8x8xf32>
    %c0_6 = arith.constant 0 : index
    %c0_7 = arith.constant 0 : index
    %10 = vector.load %arg4[%c0_6, %c0_7] : memref<8x8xf32, #tpu.memory_space<vmem>>, vector<8x8xf32>
    %11 = tpu.iota {dimensions = array<i32: 0>} : vector<8x8xi32>
    %12 = tpu.iota {dimensions = array<i32: 1>} : vector<8x8xi32>
    %13 = arith.cmpi sle, %12, %11 : vector<8x8xi32>
    %cst_8 = arith.constant 0.000000e+00 : f32
    %cst_9 = arith.constant -1.000000e+30 : f32
    %14 = vector.broadcast %cst_8 : f32 to vector<8x8xf32>
    %15 = vector.broadcast %cst_9 : f32 to vector<8x8xf32>
    %16 = arith.select %13, %14, %15 : vector<8x8xi1>, vector<8x8xf32>
    %17 = arith.mulf %8, %8 : vector<8x32xf32>
    %cst_10 = arith.constant dense<0.000000e+00> : vector<8xf32>
    %18 = vector.multi_reduction <add>, %17, %cst_10 [1] : vector<8x32xf32> to vector<8xf32>
    %19 = vector.shape_cast %18 : vector<8xf32> to vector<8x1xf32>
    %cst_11 = arith.constant 3.200000e+01 : f32
    %20 = vector.broadcast %cst_11 : f32 to vector<8x1xf32>
    %21 = arith.divf %19, %20 : vector<8x1xf32>
    %cst_12 = arith.constant 9.99999974E-6 : f32
    %22 = vector.broadcast %cst_12 : f32 to vector<8x1xf32>
    %23 = arith.addf %21, %22 : vector<8x1xf32>
    %24 = math.rsqrt %23 : vector<8x1xf32>
    %25 = vector.broadcast %24 : vector<8x1xf32> to vector<8x32xf32>
    %26 = arith.mulf %8, %25 : vector<8x32xf32>
    %27 = vector.shape_cast %26 : vector<8x32xf32> to vector<1x8x32xf32>
    %28 = vector.shape_cast %27 : vector<1x8x32xf32> to vector<1x8x32xf32>
    %29 = vector.broadcast %28 : vector<1x8x32xf32> to vector<4x8x32xf32>
    %c0_13 = arith.constant 0 : index
    %c0_14 = arith.constant 0 : index
    %c0_15 = arith.constant 0 : index
    %c0_16 = arith.constant 0 : index
    %30 = vector.load %arg5[%c0_13, %c0_14, %c0_15, %c0_16] : memref<2x4x32x40xf32, #tpu.memory_space<vmem>>, vector<1x4x32x40xf32>
    %31 = vector.shape_cast %30 : vector<1x4x32x40xf32> to vector<4x32x40xf32>
    %cst_17 = arith.constant dense<0.000000e+00> : vector<4x8x40xf32>
    %32 = tpu.matmul %29, %31, %cst_17 {dimension_numbers = #tpu.dot_dimension_numbers<[2], [1], [1], [2], [0, 0, 0, 1, 1, 2], [0], [0]>} : vector<4x8x32xf32>, vector<4x32x40xf32>, vector<4x8x40xf32> -> vector<4x8x40xf32>
    %33 = vector.extract_strided_slice %32 {offsets = [0, 0, 0], sizes = [4, 8, 8], strides = [1, 1, 1]} : vector<4x8x40xf32> to vector<4x8x8xf32>
    %34 = vector.shape_cast %9 : vector<8x8xf32> to vector<1x8x8xf32>
    %35 = vector.broadcast %34 : vector<1x8x8xf32> to vector<4x8x8xf32>
    %36 = arith.mulf %33, %35 : vector<4x8x8xf32>
    %37 = vector.extract_strided_slice %32 {offsets = [0, 0, 8], sizes = [4, 8, 8], strides = [1, 1, 1]} : vector<4x8x40xf32> to vector<4x8x8xf32>
    %38 = vector.shape_cast %10 : vector<8x8xf32> to vector<1x8x8xf32>
    %39 = vector.broadcast %38 : vector<1x8x8xf32> to vector<4x8x8xf32>
    %40 = arith.mulf %37, %39 : vector<4x8x8xf32>
    %41 = arith.addf %36, %40 : vector<4x8x8xf32>
    %42 = vector.extract_strided_slice %32 {offsets = [0, 0, 16], sizes = [4, 8, 8], strides = [1, 1, 1]} : vector<4x8x40xf32> to vector<4x8x8xf32>
    %43 = vector.shape_cast %9 : vector<8x8xf32> to vector<1x8x8xf32>
    %44 = vector.broadcast %43 : vector<1x8x8xf32> to vector<4x8x8xf32>
    %45 = arith.mulf %42, %44 : vector<4x8x8xf32>
    %46 = vector.extract_strided_slice %32 {offsets = [0, 0, 24], sizes = [4, 8, 8], strides = [1, 1, 1]} : vector<4x8x40xf32> to vector<4x8x8xf32>
    %47 = vector.shape_cast %10 : vector<8x8xf32> to vector<1x8x8xf32>
    %48 = vector.broadcast %47 : vector<1x8x8xf32> to vector<4x8x8xf32>
    %49 = arith.mulf %46, %48 : vector<4x8x8xf32>
    %50 = arith.addf %45, %49 : vector<4x8x8xf32>
    %51 = vector.extract_strided_slice %32 {offsets = [0, 0, 32], sizes = [4, 8, 8], strides = [1, 1, 1]} : vector<4x8x40xf32> to vector<4x8x8xf32>
    %cst_18 = arith.constant dense<0.000000e+00> : vector<4x8x8xf32>
    %52 = tpu.matmul %41, %50, %cst_18 {dimension_numbers = #tpu.dot_dimension_numbers<[2], [2], [1], [1], [0, 0, 0, 1, 1, 1], [0], [0]>} : vector<4x8x8xf32>, vector<4x8x8xf32>, vector<4x8x8xf32> -> vector<4x8x8xf32>
    %53 = vector.shape_cast %16 : vector<8x8xf32> to vector<1x8x8xf32>
    %54 = vector.broadcast %53 : vector<1x8x8xf32> to vector<4x8x8xf32>
    %55 = arith.addf %52, %54 : vector<4x8x8xf32>
    %cst_19 = arith.constant dense<0xFF800000> : vector<4x8xf32>
    %56 = vector.multi_reduction <maximumf>, %55, %cst_19 [2] : vector<4x8x8xf32> to vector<4x8xf32>
    %57 = vector.shape_cast %56 : vector<4x8xf32> to vector<4x8x1xf32>
    %58 = vector.broadcast %57 : vector<4x8x1xf32> to vector<4x8x8xf32>
    %59 = arith.subf %55, %58 : vector<4x8x8xf32>
    %60 = math.exp %59 : vector<4x8x8xf32>
    %cst_20 = arith.constant dense<0.000000e+00> : vector<4x8xf32>
    %61 = vector.multi_reduction <add>, %60, %cst_20 [2] : vector<4x8x8xf32> to vector<4x8xf32>
    %62 = vector.shape_cast %61 : vector<4x8xf32> to vector<4x8x1xf32>
    %63 = tpu.reciprocal %62 {approx = true} : vector<4x8x1xf32> -> vector<4x8x1xf32>
    %64 = vector.broadcast %63 : vector<4x8x1xf32> to vector<4x8x8xf32>
    %65 = arith.mulf %60, %64 : vector<4x8x8xf32>
    %cst_21 = arith.constant dense<0.000000e+00> : vector<4x8x8xf32>
    %66 = tpu.matmul %65, %51, %cst_21 {dimension_numbers = #tpu.dot_dimension_numbers<[2], [1], [1], [2], [0, 0, 0, 1, 1, 2], [0], [0]>} : vector<4x8x8xf32>, vector<4x8x8xf32>, vector<4x8x8xf32> -> vector<4x8x8xf32>
    %c0_22 = arith.constant 0 : index
    %c0_23 = arith.constant 0 : index
    %c0_24 = arith.constant 0 : index
    %c0_25 = arith.constant 0 : index
    %67 = vector.load %arg6[%c0_22, %c0_23, %c0_24, %c0_25] : memref<2x4x8x32xf32, #tpu.memory_space<vmem>>, vector<1x4x8x32xf32>
    %68 = vector.shape_cast %67 : vector<1x4x8x32xf32> to vector<4x8x32xf32>
    %cst_26 = arith.constant dense<0.000000e+00> : vector<4x8x32xf32>
    %69 = tpu.matmul %66, %68, %cst_26 {dimension_numbers = #tpu.dot_dimension_numbers<[2], [1], [1], [2], [0, 0, 0, 1, 1, 2], [0], [0]>} : vector<4x8x8xf32>, vector<4x8x32xf32>, vector<4x8x32xf32> -> vector<4x8x32xf32>
    %cst_27 = arith.constant dense<0.000000e+00> : vector<8x32xf32>
    %70 = vector.multi_reduction <add>, %69, %cst_27 [0] : vector<4x8x32xf32> to vector<8x32xf32>
    %71 = arith.addf %8, %70 : vector<8x32xf32>
    %72 = arith.mulf %71, %71 : vector<8x32xf32>
    %cst_28 = arith.constant dense<0.000000e+00> : vector<8xf32>
    %73 = vector.multi_reduction <add>, %72, %cst_28 [1] : vector<8x32xf32> to vector<8xf32>
    %74 = vector.shape_cast %73 : vector<8xf32> to vector<8x1xf32>
    %cst_29 = arith.constant 3.200000e+01 : f32
    %75 = vector.broadcast %cst_29 : f32 to vector<8x1xf32>
    %76 = arith.divf %74, %75 : vector<8x1xf32>
    %cst_30 = arith.constant 9.99999974E-6 : f32
    %77 = vector.broadcast %cst_30 : f32 to vector<8x1xf32>
    %78 = arith.addf %76, %77 : vector<8x1xf32>
    %79 = math.rsqrt %78 : vector<8x1xf32>
    %80 = vector.broadcast %79 : vector<8x1xf32> to vector<8x32xf32>
    %81 = arith.mulf %71, %80 : vector<8x32xf32>
    %c0_31 = arith.constant 0 : index
    %c0_32 = arith.constant 0 : index
    %c0_33 = arith.constant 0 : index
    %82 = vector.load %arg7[%c0_31, %c0_32, %c0_33] : memref<2x32x128xf32, #tpu.memory_space<vmem>>, vector<1x32x128xf32>
    %83 = vector.shape_cast %82 : vector<1x32x128xf32> to vector<32x128xf32>
    %cst_34 = arith.constant dense<0.000000e+00> : vector<8x128xf32>
    %84 = tpu.matmul %81, %83, %cst_34 {dimension_numbers = #tpu.dot_dimension_numbers<[1], [0], [0], [1], [0, 0, 1, 1], [], []>} : vector<8x32xf32>, vector<32x128xf32>, vector<8x128xf32> -> vector<8x128xf32>
    %85 = vector.extract_strided_slice %84 {offsets = [0, 0], sizes = [8, 64], strides = [1, 1]} : vector<8x128xf32> to vector<8x64xf32>
    %86 = vector.extract_strided_slice %84 {offsets = [0, 64], sizes = [8, 64], strides = [1, 1]} : vector<8x128xf32> to vector<8x64xf32>
    %87 = arith.negf %85 : vector<8x64xf32>
    %88 = math.exp %87 : vector<8x64xf32>
    %cst_35 = arith.constant 1.000000e+00 : f32
    %89 = vector.broadcast %cst_35 : f32 to vector<8x64xf32>
    %90 = arith.addf %89, %88 : vector<8x64xf32>
    %91 = arith.divf %89, %90 : vector<8x64xf32>
    %92 = arith.mulf %85, %91 : vector<8x64xf32>
    %93 = arith.mulf %92, %86 : vector<8x64xf32>
    %c0_36 = arith.constant 0 : index
    %c0_37 = arith.constant 0 : index
    %c0_38 = arith.constant 0 : index
    %94 = vector.load %arg8[%c0_36, %c0_37, %c0_38] : memref<2x64x32xf32, #tpu.memory_space<vmem>>, vector<1x64x32xf32>
    %95 = vector.shape_cast %94 : vector<1x64x32xf32> to vector<64x32xf32>
    %cst_39 = arith.constant dense<0.000000e+00> : vector<8x32xf32>
    %96 = tpu.matmul %93, %95, %cst_39 {dimension_numbers = #tpu.dot_dimension_numbers<[1], [0], [0], [1], [0, 0, 1, 1], [], []>} : vector<8x64xf32>, vector<64x32xf32>, vector<8x32xf32> -> vector<8x32xf32>
    %97 = arith.addf %71, %96 : vector<8x32xf32>
    %98 = arith.mulf %97, %97 : vector<8x32xf32>
    %cst_40 = arith.constant dense<0.000000e+00> : vector<8xf32>
    %99 = vector.multi_reduction <add>, %98, %cst_40 [1] : vector<8x32xf32> to vector<8xf32>
    %100 = vector.shape_cast %99 : vector<8xf32> to vector<8x1xf32>
    %cst_41 = arith.constant 3.200000e+01 : f32
    %101 = vector.broadcast %cst_41 : f32 to vector<8x1xf32>
    %102 = arith.divf %100, %101 : vector<8x1xf32>
    %cst_42 = arith.constant 9.99999974E-6 : f32
    %103 = vector.broadcast %cst_42 : f32 to vector<8x1xf32>
    %104 = arith.addf %102, %103 : vector<8x1xf32>
    %105 = math.rsqrt %104 : vector<8x1xf32>
    %106 = vector.broadcast %105 : vector<8x1xf32> to vector<8x32xf32>
    %107 = arith.mulf %97, %106 : vector<8x32xf32>
    %108 = vector.shape_cast %107 : vector<8x32xf32> to vector<1x8x32xf32>
    %109 = vector.shape_cast %108 : vector<1x8x32xf32> to vector<1x8x32xf32>
    %110 = vector.broadcast %109 : vector<1x8x32xf32> to vector<4x8x32xf32>
    %c1 = arith.constant 1 : index
    %c0_43 = arith.constant 0 : index
    %c0_44 = arith.constant 0 : index
    %c0_45 = arith.constant 0 : index
    %111 = vector.load %arg5[%c1, %c0_43, %c0_44, %c0_45] : memref<2x4x32x40xf32, #tpu.memory_space<vmem>>, vector<1x4x32x40xf32>
    %112 = vector.shape_cast %111 : vector<1x4x32x40xf32> to vector<4x32x40xf32>
    %cst_46 = arith.constant dense<0.000000e+00> : vector<4x8x40xf32>
    %113 = tpu.matmul %110, %112, %cst_46 {dimension_numbers = #tpu.dot_dimension_numbers<[2], [1], [1], [2], [0, 0, 0, 1, 1, 2], [0], [0]>} : vector<4x8x32xf32>, vector<4x32x40xf32>, vector<4x8x40xf32> -> vector<4x8x40xf32>
    %114 = vector.extract_strided_slice %113 {offsets = [0, 0, 0], sizes = [4, 8, 8], strides = [1, 1, 1]} : vector<4x8x40xf32> to vector<4x8x8xf32>
    %115 = vector.shape_cast %9 : vector<8x8xf32> to vector<1x8x8xf32>
    %116 = vector.broadcast %115 : vector<1x8x8xf32> to vector<4x8x8xf32>
    %117 = arith.mulf %114, %116 : vector<4x8x8xf32>
    %118 = vector.extract_strided_slice %113 {offsets = [0, 0, 8], sizes = [4, 8, 8], strides = [1, 1, 1]} : vector<4x8x40xf32> to vector<4x8x8xf32>
    %119 = vector.shape_cast %10 : vector<8x8xf32> to vector<1x8x8xf32>
    %120 = vector.broadcast %119 : vector<1x8x8xf32> to vector<4x8x8xf32>
    %121 = arith.mulf %118, %120 : vector<4x8x8xf32>
    %122 = arith.addf %117, %121 : vector<4x8x8xf32>
    %123 = vector.extract_strided_slice %113 {offsets = [0, 0, 16], sizes = [4, 8, 8], strides = [1, 1, 1]} : vector<4x8x40xf32> to vector<4x8x8xf32>
    %124 = vector.shape_cast %9 : vector<8x8xf32> to vector<1x8x8xf32>
    %125 = vector.broadcast %124 : vector<1x8x8xf32> to vector<4x8x8xf32>
    %126 = arith.mulf %123, %125 : vector<4x8x8xf32>
    %127 = vector.extract_strided_slice %113 {offsets = [0, 0, 24], sizes = [4, 8, 8], strides = [1, 1, 1]} : vector<4x8x40xf32> to vector<4x8x8xf32>
    %128 = vector.shape_cast %10 : vector<8x8xf32> to vector<1x8x8xf32>
    %129 = vector.broadcast %128 : vector<1x8x8xf32> to vector<4x8x8xf32>
    %130 = arith.mulf %127, %129 : vector<4x8x8xf32>
    %131 = arith.addf %126, %130 : vector<4x8x8xf32>
    %132 = vector.extract_strided_slice %113 {offsets = [0, 0, 32], sizes = [4, 8, 8], strides = [1, 1, 1]} : vector<4x8x40xf32> to vector<4x8x8xf32>
    %cst_47 = arith.constant dense<0.000000e+00> : vector<4x8x8xf32>
    %133 = tpu.matmul %122, %131, %cst_47 {dimension_numbers = #tpu.dot_dimension_numbers<[2], [2], [1], [1], [0, 0, 0, 1, 1, 1], [0], [0]>} : vector<4x8x8xf32>, vector<4x8x8xf32>, vector<4x8x8xf32> -> vector<4x8x8xf32>
    %134 = vector.shape_cast %16 : vector<8x8xf32> to vector<1x8x8xf32>
    %135 = vector.broadcast %134 : vector<1x8x8xf32> to vector<4x8x8xf32>
    %136 = arith.addf %133, %135 : vector<4x8x8xf32>
    %cst_48 = arith.constant dense<0xFF800000> : vector<4x8xf32>
    %137 = vector.multi_reduction <maximumf>, %136, %cst_48 [2] : vector<4x8x8xf32> to vector<4x8xf32>
    %138 = vector.shape_cast %137 : vector<4x8xf32> to vector<4x8x1xf32>
    %139 = vector.broadcast %138 : vector<4x8x1xf32> to vector<4x8x8xf32>
    %140 = arith.subf %136, %139 : vector<4x8x8xf32>
    %141 = math.exp %140 : vector<4x8x8xf32>
    %cst_49 = arith.constant dense<0.000000e+00> : vector<4x8xf32>
    %142 = vector.multi_reduction <add>, %141, %cst_49 [2] : vector<4x8x8xf32> to vector<4x8xf32>
    %143 = vector.shape_cast %142 : vector<4x8xf32> to vector<4x8x1xf32>
    %144 = tpu.reciprocal %143 {approx = true} : vector<4x8x1xf32> -> vector<4x8x1xf32>
    %145 = vector.broadcast %144 : vector<4x8x1xf32> to vector<4x8x8xf32>
    %146 = arith.mulf %141, %145 : vector<4x8x8xf32>
    %cst_50 = arith.constant dense<0.000000e+00> : vector<4x8x8xf32>
    %147 = tpu.matmul %146, %132, %cst_50 {dimension_numbers = #tpu.dot_dimension_numbers<[2], [1], [1], [2], [0, 0, 0, 1, 1, 2], [0], [0]>} : vector<4x8x8xf32>, vector<4x8x8xf32>, vector<4x8x8xf32> -> vector<4x8x8xf32>
    %c1_51 = arith.constant 1 : index
    %c0_52 = arith.constant 0 : index
    %c0_53 = arith.constant 0 : index
    %c0_54 = arith.constant 0 : index
    %148 = vector.load %arg6[%c1_51, %c0_52, %c0_53, %c0_54] : memref<2x4x8x32xf32, #tpu.memory_space<vmem>>, vector<1x4x8x32xf32>
    %149 = vector.shape_cast %148 : vector<1x4x8x32xf32> to vector<4x8x32xf32>
    %cst_55 = arith.constant dense<0.000000e+00> : vector<4x8x32xf32>
    %150 = tpu.matmul %147, %149, %cst_55 {dimension_numbers = #tpu.dot_dimension_numbers<[2], [1], [1], [2], [0, 0, 0, 1, 1, 2], [0], [0]>} : vector<4x8x8xf32>, vector<4x8x32xf32>, vector<4x8x32xf32> -> vector<4x8x32xf32>
    %cst_56 = arith.constant dense<0.000000e+00> : vector<8x32xf32>
    %151 = vector.multi_reduction <add>, %150, %cst_56 [0] : vector<4x8x32xf32> to vector<8x32xf32>
    %152 = arith.addf %97, %151 : vector<8x32xf32>
    %153 = arith.mulf %152, %152 : vector<8x32xf32>
    %cst_57 = arith.constant dense<0.000000e+00> : vector<8xf32>
    %154 = vector.multi_reduction <add>, %153, %cst_57 [1] : vector<8x32xf32> to vector<8xf32>
    %155 = vector.shape_cast %154 : vector<8xf32> to vector<8x1xf32>
    %cst_58 = arith.constant 3.200000e+01 : f32
    %156 = vector.broadcast %cst_58 : f32 to vector<8x1xf32>
    %157 = arith.divf %155, %156 : vector<8x1xf32>
    %cst_59 = arith.constant 9.99999974E-6 : f32
    %158 = vector.broadcast %cst_59 : f32 to vector<8x1xf32>
    %159 = arith.addf %157, %158 : vector<8x1xf32>
    %160 = math.rsqrt %159 : vector<8x1xf32>
    %161 = vector.broadcast %160 : vector<8x1xf32> to vector<8x32xf32>
    %162 = arith.mulf %152, %161 : vector<8x32xf32>
    %c1_60 = arith.constant 1 : index
    %c0_61 = arith.constant 0 : index
    %c0_62 = arith.constant 0 : index
    %163 = vector.load %arg7[%c1_60, %c0_61, %c0_62] : memref<2x32x128xf32, #tpu.memory_space<vmem>>, vector<1x32x128xf32>
    %164 = vector.shape_cast %163 : vector<1x32x128xf32> to vector<32x128xf32>
    %cst_63 = arith.constant dense<0.000000e+00> : vector<8x128xf32>
    %165 = tpu.matmul %162, %164, %cst_63 {dimension_numbers = #tpu.dot_dimension_numbers<[1], [0], [0], [1], [0, 0, 1, 1], [], []>} : vector<8x32xf32>, vector<32x128xf32>, vector<8x128xf32> -> vector<8x128xf32>
    %166 = vector.extract_strided_slice %165 {offsets = [0, 0], sizes = [8, 64], strides = [1, 1]} : vector<8x128xf32> to vector<8x64xf32>
    %167 = vector.extract_strided_slice %165 {offsets = [0, 64], sizes = [8, 64], strides = [1, 1]} : vector<8x128xf32> to vector<8x64xf32>
    %168 = arith.negf %166 : vector<8x64xf32>
    %169 = math.exp %168 : vector<8x64xf32>
    %cst_64 = arith.constant 1.000000e+00 : f32
    %170 = vector.broadcast %cst_64 : f32 to vector<8x64xf32>
    %171 = arith.addf %170, %169 : vector<8x64xf32>
    %172 = arith.divf %170, %171 : vector<8x64xf32>
    %173 = arith.mulf %166, %172 : vector<8x64xf32>
    %174 = arith.mulf %173, %167 : vector<8x64xf32>
    %c1_65 = arith.constant 1 : index
    %c0_66 = arith.constant 0 : index
    %c0_67 = arith.constant 0 : index
    %175 = vector.load %arg8[%c1_65, %c0_66, %c0_67] : memref<2x64x32xf32, #tpu.memory_space<vmem>>, vector<1x64x32xf32>
    %176 = vector.shape_cast %175 : vector<1x64x32xf32> to vector<64x32xf32>
    %cst_68 = arith.constant dense<0.000000e+00> : vector<8x32xf32>
    %177 = tpu.matmul %174, %176, %cst_68 {dimension_numbers = #tpu.dot_dimension_numbers<[1], [0], [0], [1], [0, 0, 1, 1], [], []>} : vector<8x64xf32>, vector<64x32xf32>, vector<8x32xf32> -> vector<8x32xf32>
    %178 = arith.addf %152, %177 : vector<8x32xf32>
    %179 = arith.mulf %178, %178 : vector<8x32xf32>
    %cst_69 = arith.constant dense<0.000000e+00> : vector<8xf32>
    %180 = vector.multi_reduction <add>, %179, %cst_69 [1] : vector<8x32xf32> to vector<8xf32>
    %181 = vector.shape_cast %180 : vector<8xf32> to vector<8x1xf32>
    %cst_70 = arith.constant 3.200000e+01 : f32
    %182 = vector.broadcast %cst_70 : f32 to vector<8x1xf32>
    %183 = arith.divf %181, %182 : vector<8x1xf32>
    %cst_71 = arith.constant 9.99999974E-6 : f32
    %184 = vector.broadcast %cst_71 : f32 to vector<8x1xf32>
    %185 = arith.addf %183, %184 : vector<8x1xf32>
    %186 = math.rsqrt %185 : vector<8x1xf32>
    %187 = vector.broadcast %186 : vector<8x1xf32> to vector<8x32xf32>
    %188 = arith.mulf %178, %187 : vector<8x32xf32>
    %c0_72 = arith.constant 0 : index
    %c0_73 = arith.constant 0 : index
    %189 = vector.load %arg9[%c0_72, %c0_73] : memref<32x128xf32, #tpu.memory_space<vmem>>, vector<32x128xf32>
    %cst_74 = arith.constant dense<0.000000e+00> : vector<8x128xf32>
    %190 = tpu.matmul %188, %189, %cst_74 {dimension_numbers = #tpu.dot_dimension_numbers<[1], [0], [0], [1], [0, 0, 1, 1], [], []>} : vector<8x32xf32>, vector<32x128xf32>, vector<8x128xf32> -> vector<8x128xf32>
    %c0_75 = arith.constant 0 : index
    %c0_76 = arith.constant 0 : index
    %c0_77 = arith.constant 0 : index
    %191 = vector.load %arg10[%c0_75, %c0_76, %c0_77] : memref<1x8x128xf32, #tpu.memory_space<vmem>>, vector<1x8x128xf32>
    %192 = vector.shape_cast %191 : vector<1x8x128xf32> to vector<8x128xf32>
    %193 = vector.shape_cast %190 : vector<8x128xf32> to vector<1x8x128xf32>
    tpu.vector_store %arg10[%c0_75, %c0_76, %c0_77], %193 {strides = array<i32>} : memref<1x8x128xf32, #tpu.memory_space<vmem>>, vector<1x8x128xf32>,
    return
  }
  func.func @transform_0(%arg0: i32) -> (i32, i32, i32) {
    %c0_i32 = arith.constant 0 : i32
    %c0_i32_0 = arith.constant 0 : i32
    %c0_i32_1 = arith.constant 0 : i32
    return %arg0, %c0_i32, %c0_i32_0 : i32, i32, i32
  }
  func.func @transform_1(%arg0: i32) -> (i32, i32) {
    %c0_i32 = arith.constant 0 : i32
    %c0_i32_0 = arith.constant 0 : i32
    %c0_i32_1 = arith.constant 0 : i32
    return %c0_i32, %c0_i32_0 : i32, i32
  }
  func.func @transform_2(%arg0: i32) -> (i32, i32) {
    %c0_i32 = arith.constant 0 : i32
    %c0_i32_0 = arith.constant 0 : i32
    %c0_i32_1 = arith.constant 0 : i32
    return %c0_i32, %c0_i32_0 : i32, i32
  }
  func.func @transform_3(%arg0: i32) -> (i32, i32) {
    %c0_i32 = arith.constant 0 : i32
    %c0_i32_0 = arith.constant 0 : i32
    %c0_i32_1 = arith.constant 0 : i32
    return %c0_i32, %c0_i32_0 : i32, i32
  }
  func.func @transform_4(%arg0: i32) -> (i32, i32, i32, i32) {
    %c0_i32 = arith.constant 0 : i32
    %c0_i32_0 = arith.constant 0 : i32
    %c0_i32_1 = arith.constant 0 : i32
    %c0_i32_2 = arith.constant 0 : i32
    %c0_i32_3 = arith.constant 0 : i32
    return %c0_i32, %c0_i32_0, %c0_i32_1, %c0_i32_2 : i32, i32, i32, i32
  }
  func.func @transform_5(%arg0: i32) -> (i32, i32, i32, i32) {
    %c0_i32 = arith.constant 0 : i32
    %c0_i32_0 = arith.constant 0 : i32
    %c0_i32_1 = arith.constant 0 : i32
    %c0_i32_2 = arith.constant 0 : i32
    %c0_i32_3 = arith.constant 0 : i32
    return %c0_i32, %c0_i32_0, %c0_i32_1, %c0_i32_2 : i32, i32, i32, i32
  }
  func.func @transform_6(%arg0: i32) -> (i32, i32, i32) {
    %c0_i32 = arith.constant 0 : i32
    %c0_i32_0 = arith.constant 0 : i32
    %c0_i32_1 = arith.constant 0 : i32
    %c0_i32_2 = arith.constant 0 : i32
    return %c0_i32, %c0_i32_0, %c0_i32_1 : i32, i32, i32
  }
  func.func @transform_7(%arg0: i32) -> (i32, i32, i32) {
    %c0_i32 = arith.constant 0 : i32
    %c0_i32_0 = arith.constant 0 : i32
    %c0_i32_1 = arith.constant 0 : i32
    %c0_i32_2 = arith.constant 0 : i32
    return %c0_i32, %c0_i32_0, %c0_i32_1 : i32, i32, i32
  }
  func.func @transform_8(%arg0: i32) -> (i32, i32) {
    %c0_i32 = arith.constant 0 : i32
    %c0_i32_0 = arith.constant 0 : i32
    %c0_i32_1 = arith.constant 0 : i32
    return %c0_i32, %c0_i32_0 : i32, i32
  }
  func.func @transform_9(%arg0: i32) -> (i32, i32, i32) {
    %c0_i32 = arith.constant 0 : i32
    %c0_i32_0 = arith.constant 0 : i32
    %c0_i32_1 = arith.constant 0 : i32
    return %arg0, %c0_i32, %c0_i32_0 : i32, i32, i32
  }
}

</mosaic_0001>

<llo_original>
// kernel: tpu_custom_call.1
$region0: #{tpu_custom_call.1}
  #allocation0 [shape = 'u32[]', space=smem, size = 0x4, offset = 0x4, fixed_abs, tag = 'smem constant byte address 0x4 - core index']
  #allocation1 [shape = 'u32[72,128]{1,0:T(1,128)}', space=vmem, size = 0x9000, scoped, tag = 'internal scratch']
  %s0 = inlined_call_operand.vmem [shape: s32[2,1,8], index: 0, kind: input, shape index: {}]
  %s1 = inlined_call_operand.vmem [shape: f32[64,32], index: 1, kind: input, shape index: {}]
  %s2 = inlined_call_operand.vmem [shape: f32[8,8], index: 2, kind: input, shape index: {}]
  %s3 = inlined_call_operand.vmem [shape: f32[8,8], index: 3, kind: input, shape index: {}]
  %s4 = inlined_call_operand.hbm [shape: f32[2,4,32,40], index: 4, kind: input, shape index: {}]
  %s5 = inlined_call_operand.vmem [shape: f32[2,4,8,32], index: 5, kind: input, shape index: {}]
  %s6 = inlined_call_operand.vmem [shape: f32[2,32,128], index: 6, kind: input, shape index: {}]
  %s7 = inlined_call_operand.vmem [shape: f32[2,64,32], index: 7, kind: input, shape index: {}]
  %s8 = inlined_call_operand.vmem [shape: f32[32,128], index: 8, kind: input, shape index: {}]
  %s9 = inlined_call_operand.hbm [shape: f32[2,8,128], index: 9, kind: output, shape index: {}]
  %s10 = sld [smem:[#allocation0]]
  $region73: #{tpu_custom_call.1} parent=0
    _
  %s12 = ssub.s32 1, %s10
  %s13 = scalar_select 0, %s12, %s10
  $region1: #{tpu_custom_call.1} parent=0
    #allocation2 [shape = 'u8[131072]{0}', space=vmem, size = 0x20000, scoped, tag = 'input window, operand 4, single buffered']
    #allocation3 [shape = 's32[2]{0}', space=sflag, size = 0x8, scoped, tag = 'scoped memory for tpu_custom_call.1']
    #allocation4 [shape = 's32[2]{0}', space=sflag, size = 0x8, scoped, tag = 'scoped memory for tpu_custom_call.1']
    #allocation5 [shape = 'u8[8192]{0}', space=vmem, size = 0x2000, scoped, tag = 'output window, operand 0']
    %14 = vsyncpa [#allocation3], 0
    %15 = vsyncpa [#allocation4], 0
    %s16 = scalar_lea.sflag [#allocation4], 1
    %17 = vsyncpa %s16, 0
    loop: start=0, step=1, limit=4
    $region2: #{tpu_custom_call.1} parent=1 // loop_pre_header
      _
    $region3: #{tpu_custom_call.1} parent=1 // loop_header
      %s19 = sphi 0, %s23
      %p20 = scmp.ge.s32.totalorder %s19, 4
      %s29 = sphi 0, %s31
      %s32 = sphi 0, %s29
      %s33 = sphi 0, %s32
      %s49 = sphi 0, %s33
      %s53 = sphi 0, %s53
      %s55 = sphi 0, %s53
      %s56 = sphi 0, %s55
      %s70 = sphi 0, %s56
      %s74 = sphi 0, %s74
      %s76 = sphi 0, %s74
      %s77 = sphi 0, %s76
      %s91 = sphi 0, %s77
      %s95 = sphi 0, %s95
      %s97 = sphi 0, %s95
      %s98 = sphi 0, %s97
      %s112 = sphi 0, %s98
      %s116 = sphi 0, %s116
      %s118 = sphi 0, %s116
      %s119 = sphi 0, %s118
      %s133 = sphi 0, %s119
      %s137 = sphi 0, %s137
      %s139 = sphi 0, %s137
      %s140 = sphi 0, %s139
      %s154 = sphi 0, %s140
      %s158 = sphi 0, %s158
      %s160 = sphi 0, %s158
      %s161 = sphi 0, %s160
      %s175 = sphi 0, %s161
      %s179 = sphi 0, %s179
      %s181 = sphi 0, %s179
      %s182 = sphi 0, %s181
      %s196 = sphi 0, %s182
      %s200 = sphi 0, %s200
      %s202 = sphi 0, %s200
      %s203 = sphi 0, %s202
      %s217 = sphi 0, %s203
      %s223 = sphi 0, %s225
      %s226 = sphi 0, %s223
      %s227 = sphi 0, %s226
      %s243 = sphi 0, %s227
    $region4: #{tpu_custom_call.1} parent=1 // loop_header_branch
      %22 = sbr.rel (%p20) target = $region8
    $region5: #{tpu_custom_call.1} parent=1 // loop_body
      %s24 = ssub.s32 %s19, 1
      %s25 = ssub.s32 %s19, 2
      %s26 = sadd.s32 %s19, 1
      %s27 = ssub.s32 %s19, %s26
      %p28 = scmp.eq.s32.totalorder %s27, 0
      %s30 = sadd.s32 %s29, 1
      %s31 = scalar_select %p28, %s29, %s30
      %p34 = pneg %p28
      %p35 = scmp.eq.s32.totalorder %s19, 1
      %p36 = por %p34, %p35
      %p37 = scmp.ne.s32.totalorder %s29, %s32
      %p38 = scmp.eq.s32.totalorder %s19, 0
      %p39 = por %p37, %p38
      %p40 = scmp.ne.s32.totalorder %s29, %s32
      %p41 = scmp.eq.s32.totalorder %s24, 1
      %p42 = por %p40, %p41
      %p43 = scmp.ne.s32.totalorder %s32, %s33
      %p44 = scmp.eq.s32.totalorder %s24, 0
      %p45 = por %p43, %p44
      %p46 = scmp.ne.s32.totalorder %s32, %s33
      %p47 = scmp.eq.s32.totalorder %s25, 1
      %p48 = por %p46, %p47
      %p50 = scmp.ne.s32.totalorder %s33, %s49
      %p51 = scmp.eq.s32.totalorder %s25, 0
      %p52 = por %p50, %p51
      %s54 = sadd.s32 %s53, 1
      %p57 = scmp.eq.s32.totalorder %s19, 1
      %p58 = scmp.ne.s32.totalorder %s53, %s55
      %p59 = scmp.eq.s32.totalorder %s19, 0
      %p60 = por %p58, %p59
      %p61 = scmp.ne.s32.totalorder %s53, %s55
      %p62 = scmp.eq.s32.totalorder %s24, 1
      %p63 = por %p61, %p62
      %p64 = scmp.ne.s32.totalorder %s55, %s56
      %p65 = scmp.eq.s32.totalorder %s24, 0
      %p66 = por %p64, %p65
      %p67 = scmp.ne.s32.totalorder %s55, %s56
      %p68 = scmp.eq.s32.totalorder %s25, 1
      %p69 = por %p67, %p68
      %p71 = scmp.ne.s32.totalorder %s56, %s70
      %p72 = scmp.eq.s32.totalorder %s25, 0
      %p73 = por %p71, %p72
      %s75 = sadd.s32 %s74, 1
      %p78 = scmp.eq.s32.totalorder %s19, 1
      %p79 = scmp.ne.s32.totalorder %s74, %s76
      %p80 = scmp.eq.s32.totalorder %s19, 0
      %p81 = por %p79, %p80
      %p82 = scmp.ne.s32.totalorder %s74, %s76
      %p83 = scmp.eq.s32.totalorder %s24, 1
      %p84 = por %p82, %p83
      %p85 = scmp.ne.s32.totalorder %s76, %s77
      %p86 = scmp.eq.s32.totalorder %s24, 0
      %p87 = por %p85, %p86
      %p88 = scmp.ne.s32.totalorder %s76, %s77
      %p89 = scmp.eq.s32.totalorder %s25, 1
      %p90 = por %p88, %p89
      %p92 = scmp.ne.s32.totalorder %s77, %s91
      %p93 = scmp.eq.s32.totalorder %s25, 0
      %p94 = por %p92, %p93
      %s96 = sadd.s32 %s95, 1
      %p99 = scmp.eq.s32.totalorder %s19, 1
      %p100 = scmp.ne.s32.totalorder %s95, %s97
      %p101 = scmp.eq.s32.totalorder %s19, 0
      %p102 = por %p100, %p101
      %p103 = scmp.ne.s32.totalorder %s95, %s97
      %p104 = scmp.eq.s32.totalorder %s24, 1
      %p105 = por %p103, %p104
      %p106 = scmp.ne.s32.totalorder %s97, %s98
      %p107 = scmp.eq.s32.totalorder %s24, 0
      %p108 = por %p106, %p107
      %p109 = scmp.ne.s32.totalorder %s97, %s98
      %p110 = scmp.eq.s32.totalorder %s25, 1
      %p111 = por %p109, %p110
      %p113 = scmp.ne.s32.totalorder %s98, %s112
      %p114 = scmp.eq.s32.totalorder %s25, 0
      %p115 = por %p113, %p114
      %s117 = sadd.s32 %s116, 1
      %p120 = scmp.eq.s32.totalorder %s19, 1
      %p121 = scmp.ne.s32.totalorder %s116, %s118
      %p122 = scmp.eq.s32.totalorder %s19, 0
      %p123 = por %p121, %p122
      %p124 = scmp.ne.s32.totalorder %s116, %s118
      %p125 = scmp.eq.s32.totalorder %s24, 1
      %p126 = por %p124, %p125
      %p127 = scmp.ne.s32.totalorder %s118, %s119
      %p128 = scmp.eq.s32.totalorder %s24, 0
      %p129 = por %p127, %p128
      %p130 = scmp.ne.s32.totalorder %s118, %s119
      %p131 = scmp.eq.s32.totalorder %s25, 1
      %p132 = por %p130, %p131
      %p134 = scmp.ne.s32.totalorder %s119, %s133
      %p135 = scmp.eq.s32.totalorder %s25, 0
      %p136 = por %p134, %p135
      %s138 = sadd.s32 %s137, 1
      %p141 = scmp.eq.s32.totalorder %s19, 1
      %p142 = scmp.ne.s32.totalorder %s137, %s139
      %p143 = scmp.eq.s32.totalorder %s19, 0
      %p144 = por %p142, %p143
      %p145 = scmp.ne.s32.totalorder %s137, %s139
      %p146 = scmp.eq.s32.totalorder %s24, 1
      %p147 = por %p145, %p146
      %p148 = scmp.ne.s32.totalorder %s139, %s140
      %p149 = scmp.eq.s32.totalorder %s24, 0
      %p150 = por %p148, %p149
      %p151 = scmp.ne.s32.totalorder %s139, %s140
      %p152 = scmp.eq.s32.totalorder %s25, 1
      %p153 = por %p151, %p152
      %p155 = scmp.ne.s32.totalorder %s140, %s154
      %p156 = scmp.eq.s32.totalorder %s25, 0
      %p157 = por %p155, %p156
      %s159 = sadd.s32 %s158, 1
      %p162 = scmp.eq.s32.totalorder %s19, 1
      %p163 = scmp.ne.s32.totalorder %s158, %s160
      %p164 = scmp.eq.s32.totalorder %s19, 0
      %p165 = por %p163, %p164
      %p166 = scmp.ne.s32.totalorder %s158, %s160
      %p167 = scmp.eq.s32.totalorder %s24, 1
      %p168 = por %p166, %p167
      %p169 = scmp.ne.s32.totalorder %s160, %s161
      %p170 = scmp.eq.s32.totalorder %s24, 0
      %p171 = por %p169, %p170
      %p172 = scmp.ne.s32.totalorder %s160, %s161
      %p173 = scmp.eq.s32.totalorder %s25, 1
      %p174 = por %p172, %p173
      %p176 = scmp.ne.s32.totalorder %s161, %s175
      %p177 = scmp.eq.s32.totalorder %s25, 0
      %p178 = por %p176, %p177
      %s180 = sadd.s32 %s179, 1
      %p183 = scmp.eq.s32.totalorder %s19, 1
      %p184 = scmp.ne.s32.totalorder %s179, %s181
      %p185 = scmp.eq.s32.totalorder %s19, 0
      %p186 = por %p184, %p185
      %p187 = scmp.ne.s32.totalorder %s179, %s181
      %p188 = scmp.eq.s32.totalorder %s24, 1
      %p189 = por %p187, %p188
      %p190 = scmp.ne.s32.totalorder %s181, %s182
      %p191 = scmp.eq.s32.totalorder %s24, 0
      %p192 = por %p190, %p191
      %p193 = scmp.ne.s32.totalorder %s181, %s182
      %p194 = scmp.eq.s32.totalorder %s25, 1
      %p195 = por %p193, %p194
      %p197 = scmp.ne.s32.totalorder %s182, %s196
      %p198 = scmp.eq.s32.totalorder %s25, 0
      %p199 = por %p197, %p198
      %s201 = sadd.s32 %s200, 1
      %p204 = scmp.eq.s32.totalorder %s19, 1
      %p205 = scmp.ne.s32.totalorder %s200, %s202
      %p206 = scmp.eq.s32.totalorder %s19, 0
      %p207 = por %p205, %p206
      %p208 = scmp.ne.s32.totalorder %s200, %s202
      %p209 = scmp.eq.s32.totalorder %s24, 1
      %p210 = por %p208, %p209
      %p211 = scmp.ne.s32.totalorder %s202, %s203
      %p212 = scmp.eq.s32.totalorder %s24, 0
      %p213 = por %p211, %p212
      %p214 = scmp.ne.s32.totalorder %s202, %s203
      %p215 = scmp.eq.s32.totalorder %s25, 1
      %p216 = por %p214, %p215
      %p218 = scmp.ne.s32.totalorder %s203, %s217
      %p219 = scmp.eq.s32.totalorder %s25, 0
      %p220 = por %p218, %p219
      %s221 = ssub.s32 %s19, %s26
      %p222 = scmp.eq.s32.totalorder %s221, 0
      %s224 = sadd.s32 %s223, 1
      %s225 = scalar_select %p222, %s223, %s224
      %p228 = pneg %p222
      %p229 = scmp.eq.s32.totalorder %s19, 1
      %p230 = por %p228, %p229
      %p231 = scmp.ne.s32.totalorder %s223, %s226
      %p232 = scmp.eq.s32.totalorder %s19, 0
      %p233 = por %p231, %p232
      %p234 = scmp.ne.s32.totalorder %s223, %s226
      %p235 = scmp.eq.s32.totalorder %s24, 1
      %p236 = por %p234, %p235
      %p237 = scmp.ne.s32.totalorder %s226, %s227
      %p238 = scmp.eq.s32.totalorder %s24, 0
      %p239 = por %p237, %p238
      %p240 = scmp.ne.s32.totalorder %s226, %s227
      %p241 = scmp.eq.s32.totalorder %s25, 1
      %p242 = por %p240, %p241
      %p244 = scmp.ne.s32.totalorder %s227, %s243
      %p245 = scmp.eq.s32.totalorder %s25, 0
      %p246 = por %p244, %p245
      %p247 = scmp.le.s32.totalorder 1, %s19
      %p248 = scmp.lt.s32.totalorder %s19, 3
      %p249 = pnand %p247, %p248
      %p250 = pneg %p249
      // Predicated region
      $region9: #{tpu_custom_call.1} parent=5 // pred_check
        _
      $region10: #{tpu_custom_call.1} parent=5 // pred_check_branch
        %252 = sbr.rel (%p249) target = $region12
      $region11: #{tpu_custom_call.1} parent=5 // pred_region
        %s253 = ssub.s32 %s19, 1
        // Predicated region
        $region13: #{tpu_custom_call.1} parent=11 // pred_check
          %p254 = pneg %p66
        $region14: #{tpu_custom_call.1} parent=11 // pred_check_branch
          %256 = sbr.rel (%p254) target = $region16
        $region15: #{tpu_custom_call.1} parent=11 // pred_region
          _
        $region16: #{tpu_custom_call.1} parent=11 // pred_fallthru
          _
        // Predicated region
        $region17: #{tpu_custom_call.1} parent=11 // pred_check
          %p257 = pneg %p87
        $region18: #{tpu_custom_call.1} parent=11 // pred_check_branch
          %259 = sbr.rel (%p257) target = $region20
        $region19: #{tpu_custom_call.1} parent=11 // pred_region
          _
        $region20: #{tpu_custom_call.1} parent=11 // pred_fallthru
          _
        // Predicated region
        $region21: #{tpu_custom_call.1} parent=11 // pred_check
          %p260 = pneg %p108
        $region22: #{tpu_custom_call.1} parent=11 // pred_check_branch
          %262 = sbr.rel (%p260) target = $region24
        $region23: #{tpu_custom_call.1} parent=11 // pred_region
          _
        $region24: #{tpu_custom_call.1} parent=11 // pred_fallthru
          _
        // Predicated region
        $region25: #{tpu_custom_call.1} parent=11 // pred_check
          %p263 = pneg %p129
        $region26: #{tpu_custom_call.1} parent=11 // pred_check_branch
          %265 = sbr.rel (%p263) target = $region28
        $region27: #{tpu_custom_call.1} parent=11 // pred_region
          %267 = vsyncadd [#allocation3], 0
          %s268 = sshll.u32 %s4, 4
          %s269 = int_to_ptr.hbm [resolvable:$true] %s268
          %s270 = sshll.u32 [#allocation2], 4
          %s271 = int_to_ptr.vmem [resolvable:$true] %s270
          %276 = dma.hbm_to_vmem [thread:$0]  %s269, 4096, %s271, [#allocation3], 128, 128, 8
        $region28: #{tpu_custom_call.1} parent=11 // pred_fallthru
          _
        // Predicated region
        $region29: #{tpu_custom_call.1} parent=11 // pred_check
          %p277 = pneg %p150
        $region30: #{tpu_custom_call.1} parent=11 // pred_check_branch
          %279 = sbr.rel (%p277) target = $region32
        $region31: #{tpu_custom_call.1} parent=11 // pred_region
          _
        $region32: #{tpu_custom_call.1} parent=11 // pred_fallthru
          _
        // Predicated region
        $region33: #{tpu_custom_call.1} parent=11 // pred_check
          %p280 = pneg %p171
        $region34: #{tpu_custom_call.1} parent=11 // pred_check_branch
          %282 = sbr.rel (%p280) target = $region36
        $region35: #{tpu_custom_call.1} parent=11 // pred_region
          _
        $region36: #{tpu_custom_call.1} parent=11 // pred_fallthru
          _
        // Predicated region
        $region37: #{tpu_custom_call.1} parent=11 // pred_check
          %p283 = pneg %p192
        $region38: #{tpu_custom_call.1} parent=11 // pred_check_branch
          %285 = sbr.rel (%p283) target = $region40
        $region39: #{tpu_custom_call.1} parent=11 // pred_region
          _
        $region40: #{tpu_custom_call.1} parent=11 // pred_fallthru
          _
        // Predicated region
        $region41: #{tpu_custom_call.1} parent=11 // pred_check
          %p286 = pneg %p213
        $region42: #{tpu_custom_call.1} parent=11 // pred_check_branch
          %288 = sbr.rel (%p286) target = $region44
        $region43: #{tpu_custom_call.1} parent=11 // pred_region
          _
        $region44: #{tpu_custom_call.1} parent=11 // pred_fallthru
          _
      $region12: #{tpu_custom_call.1} parent=5 // pred_fallthru
        _
      %p289 = scmp.lt.s32.totalorder %s19, 2
      // Predicated region
      $region45: #{tpu_custom_call.1} parent=5 // pred_check
        %p290 = pneg %p289
      $region46: #{tpu_custom_call.1} parent=5 // pred_check_branch
        %292 = sbr.rel (%p290) target = $region48
      $region47: #{tpu_custom_call.1} parent=5 // pred_region
        // Predicated region
        $region49: #{tpu_custom_call.1} parent=47 // pred_check
          %p293 = pneg %p39
        $region50: #{tpu_custom_call.1} parent=47 // pred_check_branch
          %295 = sbr.rel (%p293) target = $region52
        $region51: #{tpu_custom_call.1} parent=47 // pred_region
          %p296 = scmp.lt.s32.totalorder %s19, 1
          %s297 = scalar_select %p296, %s19, 1
          %s298 = scalar_lea.vmem %s0, %s297
        $region52: #{tpu_custom_call.1} parent=47 // pred_fallthru
          _
      $region48: #{tpu_custom_call.1} parent=5 // pred_fallthru
        _
      %p299 = scmp.le.s32.totalorder 1, %s19
      %p300 = scmp.lt.s32.totalorder %s19, 3
      %p301 = pnand %p299, %p300
      %p302 = pneg %p301
      // Predicated region
      $region53: #{tpu_custom_call.1} parent=5 // pred_check
        _
      $region54: #{tpu_custom_call.1} parent=5 // pred_check_branch
        %304 = sbr.rel (%p301) target = $region56
      $region55: #{tpu_custom_call.1} parent=5 // pred_region
        %s305 = ssub.s32 %s19, 1
        // Predicated region
        $region57: #{tpu_custom_call.1} parent=55 // pred_check
          %p306 = pneg %p129
        $region58: #{tpu_custom_call.1} parent=55 // pred_check_branch
          %308 = sbr.rel (%p306) target = $region60
        $region59: #{tpu_custom_call.1} parent=55 // pred_region
          %310 = dma.done [#allocation3], 4096
        $region60: #{tpu_custom_call.1} parent=55 // pred_fallthru
          _
        %p311 = scmp.lt.s32.totalorder %s24, 1
        %s312 = scalar_select %p311, %s24, 1
        %s313 = scalar_lea.vmem %s0, %s312
        %p314 = pneg %p45
        %p315 = pneg %p42
        %p316 = pneg %p66
        %p317 = pneg %p63
        %p318 = pneg %p87
        %p319 = pneg %p84
        %p320 = pneg %p108
        %p321 = pneg %p105
        %p322 = pneg %p129
        %p323 = pneg %p126
        %p324 = pneg %p150
        %p325 = pneg %p147
        %p326 = pneg %p171
        %p327 = pneg %p168
        %p328 = pneg %p192
        %p329 = pneg %p189
        %p330 = pneg %p213
        %p331 = pneg %p210
        %p332 = pneg %p239
        %p333 = pneg %p236
        %s334 = sand.u32 %s226, 1
        %s335 = scalar_lea.sflag [#allocation4], %s334
        %s336 = sand.u32 %s226, 1
        %s337 = smul.addr %s336, 8
        %s338 = scalar_lea.vmem [#allocation5], %s337
        %p339 = scmp.lt.s32.totalorder %s24, 1
        %s340 = scalar_select %p339, %s24, 1
        %s341 = scalar_lea.vmem %s0, %s340
        %v342 = vld [vmem:[%s341] sm:$0x1]
        %v343 = vlaneseq
        %v344 = vshrl.u32 %v343, 7
        %v345 = vadd.s32 %v344, 8
        %v346 = vadd.s32 %v344, 16
        %v347 = vadd.s32 %v344, 24
        %v348 = vadd.s32 %v344, 32
        %v349 = vadd.s32 %v344, 40
        %v350 = vadd.s32 %v344, 48
        %v351 = vadd.s32 %v344, 56
        %v352 = vperm.slane %v342, 0
        %vm353 = vcmp.eq.s32.totalorder %v344, %v352
        %vm354 = vcmp.eq.s32.totalorder %v345, %v352
        %vm355 = vcmp.eq.s32.totalorder %v346, %v352
        %vm356 = vcmp.eq.s32.totalorder %v347, %v352
        %vm357 = vcmp.eq.s32.totalorder %v348, %v352
        %vm358 = vcmp.eq.s32.totalorder %v349, %v352
        %vm359 = vcmp.eq.s32.totalorder %v350, %v352
        %vm360 = vcmp.eq.s32.totalorder %v351, %v352
        %v361 = vsel %vm353, 1, 0
        %v362 = vsel %vm354, 1, 0
        %v363 = vsel %vm355, 1, 0
        %v364 = vsel %vm356, 1, 0
        %v365 = vsel %vm357, 1, 0
        %v366 = vsel %vm358, 1, 0
        %v367 = vsel %vm359, 1, 0
        %v368 = vsel %vm360, 1, 0
        %v369 = vcvt.s32.f32 %v361
        %v370 = vcvt.s32.f32 %v362
        %v371 = vcvt.s32.f32 %v363
        %v372 = vcvt.s32.f32 %v364
        %v373 = vcvt.s32.f32 %v365
        %v374 = vcvt.s32.f32 %v366
        %v375 = vcvt.s32.f32 %v367
        %v376 = vcvt.s32.f32 %v368
        %v377 = vld [vmem:[%s1] sm:$0xff]
        %v378 = vld [vmem:[%s1 + $0x8] sm:$0xff]
        %v379 = vld [vmem:[%s1 + $0x10] sm:$0xff]
        %v380 = vld [vmem:[%s1 + $0x18] sm:$0xff]
        %v381 = vld [vmem:[%s1 + $0x20] sm:$0xff]
        %v382 = vld [vmem:[%s1 + $0x28] sm:$0xff]
        %v383 = vld [vmem:[%s1 + $0x30] sm:$0xff]
        %v384 = vld [vmem:[%s1 + $0x38] sm:$0xff]
        %385 = vxpose.xlu0.b32.start [1/16] %v369, 128
        %386 = vxpose.xlu0.b32.cont [2/16] %v370, 128
        %387 = vxpose.xlu0.b32.cont [3/16] %v371, 128
        %388 = vxpose.xlu0.b32.cont [4/16] %v372, 128
        %389 = vxpose.xlu0.b32.cont [5/16] %v373, 128
        %390 = vxpose.xlu0.b32.cont [6/16] %v374, 128
        %391 = vxpose.xlu0.b32.cont [7/16] %v375, 128
        %392 = vxpose.xlu0.b32.cont [8/16] %v376, 128
        %393 = vxpose.xlu0.b32.cont [9/16] 0.0, 128
        %394 = vxpose.xlu0.b32.cont [10/16] 0.0, 128
        %395 = vxpose.xlu0.b32.cont [11/16] 0.0, 128
        %396 = vxpose.xlu0.b32.cont [12/16] 0.0, 128
        %397 = vxpose.xlu0.b32.cont [13/16] 0.0, 128
        %398 = vxpose.xlu0.b32.cont [14/16] 0.0, 128
        %399 = vxpose.xlu0.b32.cont [15/16] 0.0, 128
        %400 = vxpose.xlu0.b32.end [16/16] 0.0, 128
        %v401 = vpop.trf.xlu0
        %v402 = vpop.trf.xlu0
        %v403 = vpop.trf.xlu0
        %v404 = vpop.trf.xlu0
        %v405 = vpop.trf.xlu0
        %v406 = vpop.trf.xlu0
        %v407 = vpop.trf.xlu0
        %v408 = vpop.trf.xlu0
        %v409 = vpop.trf.xlu0
        %v410 = vpop.trf.xlu0
        %v411 = vpop.trf.xlu0
        %v412 = vpop.trf.xlu0
        %v413 = vpop.trf.xlu0
        %v414 = vpop.trf.xlu0
        %v415 = vpop.trf.xlu0
        %v416 = vpop.trf.xlu0
        %vm417 = vcmask 523264
        %v419 = vsel %vm417, %v401, 0
        %421 = vmatpush.msra.mxu0 0.0
        %422 = vmatpush.msra.mxu0 0.0
        %423 = vmatpush.msra.mxu0 0.0
        %424 = vmatpush.msra.mxu0 0.0
        %425 = vmatpush.msra.mxu0 0.0
        %426 = vmatpush.msra.mxu0 0.0
        %427 = vmatpush.msra.mxu0 0.0
        %428 = vmatpush.msra.mxu0 0.0
        %429 = vmatpush.msra.mxu0 %v384
        %430 = vmatpush.msra.mxu0 %v383
        %431 = vmatpush.msra.mxu0 %v382
        %432 = vmatpush.msra.mxu0 %v381
        %433 = vmatpush.msra.mxu0 %v380
        %434 = vmatpush.msra.mxu0 %v379
        %435 = vmatpush.msra.mxu0 %v378
        %436 = vmatpush.msra.mxu0 %v377
        %437 = vmatmul.f32.gmra.mxu0 %v419
        %v438 = vpop.f32.mrf.mxu0
        %v439 = vadd.f32 0.0, %v438
        %440 = vdwg.mxu0
        %v441 = vld [vmem:[%s2] sm:$0xff]
        %v442 = vld [vmem:[%s3] sm:$0xff]
        %v443 = vlaneseq
        %v444 = vand.u32 %v443, 127
        %vm445 = vcmp.le.s32.totalorder %v444, %v344
        %v446 = vsel %vm445, 0.0, -1e+30
        %v447 = vmul.f32 %v439, %v439
        %vm448 = vcmask 261120
        %v449 = vsel %vm448, %v447, 0.0
        %450 = vadd.xlane.f32.xlu0 %v449
        %v451 = vpop.xlane.xlu0 %450
        %v452 = vrcp.pop 32.0
        %v453 = vmul.f32 32.0, %v452
        %v454 = vsub.f32 1.0, %v453
        %v455 = vmul.f32 %v452, %v454
        %v456 = vadd.f32 %v452, %v455
        %vm457 = vweird.f32 %v452
        %v458 = vsel %vm457, %v452, %v456
        %v459 = vmul.f32 %v451, %v458
        %v460 = vadd.f32 %v459, 1e-05
        %v461 = vrsqrt.pop %v460
        %v462 = vmul.f32 %v461, %v460
        %v463 = vmul.f32 %v462, %v461
        %v464 = vmul.f32 0.5, %v463
        %v465 = vsub.f32 1.5, %v464
        %v466 = vmul.f32 %v461, %v465
        %vm467 = vweird.f32 %v460
        %vm468 = vweird.f32 %v461
        %vm469 = vmor %vm467, %vm468
        %v470 = vsel %vm469, %v461, %v466
        %v471 = vmul.f32 %v439, %v470
        %v472 = vld [vmem:[#allocation2] sm:$0xff]
        %v473 = vld [vmem:[#allocation2 + $0x8] sm:$0xff]
        %v474 = vld [vmem:[#allocation2 + $0x10] sm:$0xff]
        %v475 = vld [vmem:[#allocation2 + $0x18] sm:$0xff]
        %v476 = vld [vmem:[#allocation2 + $0x20] sm:$0xff]
        %v477 = vld [vmem:[#allocation2 + $0x28] sm:$0xff]
        %v478 = vld [vmem:[#allocation2 + $0x30] sm:$0xff]
        %v479 = vld [vmem:[#allocation2 + $0x38] sm:$0xff]
        %v480 = vld [vmem:[#allocation2 + $0x40] sm:$0xff]
        %v481 = vld [vmem:[#allocation2 + $0x48] sm:$0xff]
        %v482 = vld [vmem:[#allocation2 + $0x50] sm:$0xff]
        %v483 = vld [vmem:[#allocation2 + $0x58] sm:$0xff]
        %v484 = vld [vmem:[#allocation2 + $0x60] sm:$0xff]
        %v485 = vld [vmem:[#allocation2 + $0x68] sm:$0xff]
        %v486 = vld [vmem:[#allocation2 + $0x70] sm:$0xff]
        %v487 = vld [vmem:[#allocation2 + $0x78] sm:$0xff]
        %v489 = vsel %vm448, %v471, 0
        %491 = vmatpush.msra.mxu0 0.0
        %492 = vmatpush.msra.mxu0 0.0
        %493 = vmatpush.msra.mxu0 0.0
        %494 = vmatpush.msra.mxu0 0.0
        %495 = vmatpush.msra.mxu0 0.0
        %496 = vmatpush.msra.mxu0 0.0
        %497 = vmatpush.msra.mxu0 0.0
        %498 = vmatpush.msra.mxu0 0.0
        %499 = vmatpush.msra.mxu0 0.0
        %500 = vmatpush.msra.mxu0 0.0
        %501 = vmatpush.msra.mxu0 0.0
        %502 = vmatpush.msra.mxu0 0.0
        %503 = vmatpush.msra.mxu0 %v475
        %504 = vmatpush.msra.mxu0 %v474
        %505 = vmatpush.msra.mxu0 %v473
        %506 = vmatpush.msra.mxu0 %v472
        %507 = vmatmul.f32.gmra.mxu0 %v489
        %v508 = vpop.f32.mrf.mxu0
        %v509 = vadd.f32 0.0, %v508
        %510 = vdwg.mxu0
        %511 = vmatpush.msra.mxu0 0.0
        %512 = vmatpush.msra.mxu0 0.0
        %513 = vmatpush.msra.mxu0 0.0
        %514 = vmatpush.msra.mxu0 0.0
        %515 = vmatpush.msra.mxu0 0.0
        %516 = vmatpush.msra.mxu0 0.0
        %517 = vmatpush.msra.mxu0 0.0
        %518 = vmatpush.msra.mxu0 0.0
        %519 = vmatpush.msra.mxu0 0.0
        %520 = vmatpush.msra.mxu0 0.0
        %521 = vmatpush.msra.mxu0 0.0
        %522 = vmatpush.msra.mxu0 0.0
        %523 = vmatpush.msra.mxu0 %v479
        %524 = vmatpush.msra.mxu0 %v478
        %525 = vmatpush.msra.mxu0 %v477
        %526 = vmatpush.msra.mxu0 %v476
        %527 = vmatmul.f32.gmra.mxu0 %v489
        %v528 = vpop.f32.mrf.mxu0
        %v529 = vadd.f32 0.0, %v528
        %530 = vdwg.mxu0
        %531 = vmatpush.msra.mxu0 0.0
        %532 = vmatpush.msra.mxu0 0.0
        %533 = vmatpush.msra.mxu0 0.0
        %534 = vmatpush.msra.mxu0 0.0
        %535 = vmatpush.msra.mxu0 0.0
        %536 = vmatpush.msra.mxu0 0.0
        %537 = vmatpush.msra.mxu0 0.0
        %538 = vmatpush.msra.mxu0 0.0
        %539 = vmatpush.msra.mxu0 0.0
        %540 = vmatpush.msra.mxu0 0.0
        %541 = vmatpush.msra.mxu0 0.0
        %542 = vmatpush.msra.mxu0 0.0
        %543 = vmatpush.msra.mxu0 %v483
        %544 = vmatpush.msra.mxu0 %v482
        %545 = vmatpush.msra.mxu0 %v481
        %546 = vmatpush.msra.mxu0 %v480
        %547 = vmatmul.f32.gmra.mxu0 %v489
        %v548 = vpop.f32.mrf.mxu0
        %v549 = vadd.f32 0.0, %v548
        %550 = vdwg.mxu0
        %551 = vmatpush.msra.mxu0 0.0
        %552 = vmatpush.msra.mxu0 0.0
        %553 = vmatpush.msra.mxu0 0.0
        %554 = vmatpush.msra.mxu0 0.0
        %555 = vmatpush.msra.mxu0 0.0
        %556 = vmatpush.msra.mxu0 0.0
        %557 = vmatpush.msra.mxu0 0.0
        %558 = vmatpush.msra.mxu0 0.0
        %559 = vmatpush.msra.mxu0 0.0
        %560 = vmatpush.msra.mxu0 0.0
        %561 = vmatpush.msra.mxu0 0.0
        %562 = vmatpush.msra.mxu0 0.0
        %563 = vmatpush.msra.mxu0 %v487
        %564 = vmatpush.msra.mxu0 %v486
        %565 = vmatpush.msra.mxu0 %v485
        %566 = vmatpush.msra.mxu0 %v484
        %567 = vmatmul.f32.gmra.mxu0 %v489
        %v568 = vpop.f32.mrf.mxu0
        %v569 = vadd.f32 0.0, %v568
        %570 = vdwg.mxu0
        %v571 = vmul.f32 %v509, %v441
        %v572 = vmul.f32 %v529, %v441
        %v573 = vmul.f32 %v549, %v441
        %v574 = vmul.f32 %v569, %v441
        %576 = vrot.lane.b32.xlu0 %v442, 8
        %v577 = vpop.permute.xlu0 %576
        %v579 = vmul.f32 %v509, %v577
        %v580 = vmul.f32 %v529, %v577
        %v581 = vmul.f32 %v549, %v577
        %v582 = vmul.f32 %v569, %v577
        %587 = vrot.lane.b32.xlu0 %v579, 120
        %v588 = vpop.permute.xlu0 %587
        %589 = vrot.lane.b32.xlu0 %v580, 120
        %v590 = vpop.permute.xlu0 %589
        %591 = vrot.lane.b32.xlu0 %v581, 120
        %v592 = vpop.permute.xlu0 %591
        %593 = vrot.lane.b32.xlu0 %v582, 120
        %v594 = vpop.permute.xlu0 %593
        %v599 = vadd.f32 %v571, %v588
        %v600 = vadd.f32 %v572, %v590
        %v601 = vadd.f32 %v573, %v592
        %v602 = vadd.f32 %v574, %v594
        %604 = vrot.lane.b32.xlu0 %v441, 16
        %v605 = vpop.permute.xlu0 %604
        %v607 = vmul.f32 %v509, %v605
        %v608 = vmul.f32 %v529, %v605
        %v609 = vmul.f32 %v549, %v605
        %v610 = vmul.f32 %v569, %v605
        %611 = vrot.lane.b32.xlu0 %v442, 24
        %v612 = vpop.permute.xlu0 %611
        %v614 = vmul.f32 %v509, %v612
        %v615 = vmul.f32 %v529, %v612
        %v616 = vmul.f32 %v549, %v612
        %v617 = vmul.f32 %v569, %v612
        %622 = vrot.lane.b32.xlu0 %v614, 120
        %v623 = vpop.permute.xlu0 %622
        %624 = vrot.lane.b32.xlu0 %v615, 120
        %v625 = vpop.permute.xlu0 %624
        %626 = vrot.lane.b32.xlu0 %v616, 120
        %v627 = vpop.permute.xlu0 %626
        %628 = vrot.lane.b32.xlu0 %v617, 120
        %v629 = vpop.permute.xlu0 %628
        %v634 = vadd.f32 %v607, %v623
        %v635 = vadd.f32 %v608, %v625
        %v636 = vadd.f32 %v609, %v627
        %v637 = vadd.f32 %v610, %v629
        %639 = vrot.lane.b32.xlu0 %v634, 112
        %v640 = vpop.permute.xlu0 %639
        %vm641 = vcmask 64512
        %v643 = vsel %vm641, %v599, 0
        %v645 = vsel %vm641, %v640, 0
        %647 = vmatpush.xpose.msra.mxu0 0.0
        %648 = vmatpush.xpose.msra.mxu0 0.0
        %649 = vmatpush.xpose.msra.mxu0 0.0
        %650 = vmatpush.xpose.msra.mxu0 0.0
        %651 = vmatpush.xpose.msra.mxu0 0.0
        %652 = vmatpush.xpose.msra.mxu0 0.0
        %653 = vmatpush.xpose.msra.mxu0 0.0
        %654 = vmatpush.xpose.msra.mxu0 0.0
        %655 = vmatpush.xpose.msra.mxu0 0.0
        %656 = vmatpush.xpose.msra.mxu0 0.0
        %657 = vmatpush.xpose.msra.mxu0 0.0
        %658 = vmatpush.xpose.msra.mxu0 0.0
        %659 = vmatpush.xpose.msra.mxu0 0.0
        %660 = vmatpush.xpose.msra.mxu0 0.0
        %661 = vmatpush.xpose.msra.mxu0 0.0
        %662 = vmatpush.xpose.msra.mxu0 %v645
        %663 = vmatmul.f32.gmra.mxu0 %v643
        %v664 = vpop.f32.mrf.mxu0
        %v665 = vadd.f32 %v446, %v664
        %666 = vdwg.mxu0
        %668 = vrot.lane.b32.xlu0 %v635, 112
        %v669 = vpop.permute.xlu0 %668
        %v671 = vsel %vm641, %v600, 0
        %v673 = vsel %vm641, %v669, 0
        %675 = vmatpush.xpose.msra.mxu0 0.0
        %676 = vmatpush.xpose.msra.mxu0 0.0
        %677 = vmatpush.xpose.msra.mxu0 0.0
        %678 = vmatpush.xpose.msra.mxu0 0.0
        %679 = vmatpush.xpose.msra.mxu0 0.0
        %680 = vmatpush.xpose.msra.mxu0 0.0
        %681 = vmatpush.xpose.msra.mxu0 0.0
        %682 = vmatpush.xpose.msra.mxu0 0.0
        %683 = vmatpush.xpose.msra.mxu0 0.0
        %684 = vmatpush.xpose.msra.mxu0 0.0
        %685 = vmatpush.xpose.msra.mxu0 0.0
        %686 = vmatpush.xpose.msra.mxu0 0.0
        %687 = vmatpush.xpose.msra.mxu0 0.0
        %688 = vmatpush.xpose.msra.mxu0 0.0
        %689 = vmatpush.xpose.msra.mxu0 0.0
        %690 = vmatpush.xpose.msra.mxu0 %v673
        %691 = vmatmul.f32.gmra.mxu0 %v671
        %v692 = vpop.f32.mrf.mxu0
        %v693 = vadd.f32 %v446, %v692
        %694 = vdwg.mxu0
        %696 = vrot.lane.b32.xlu0 %v636, 112
        %v697 = vpop.permute.xlu0 %696
        %v699 = vsel %vm641, %v601, 0
        %v701 = vsel %vm641, %v697, 0
        %703 = vmatpush.xpose.msra.mxu0 0.0
        %704 = vmatpush.xpose.msra.mxu0 0.0
        %705 = vmatpush.xpose.msra.mxu0 0.0
        %706 = vmatpush.xpose.msra.mxu0 0.0
        %707 = vmatpush.xpose.msra.mxu0 0.0
        %708 = vmatpush.xpose.msra.mxu0 0.0
        %709 = vmatpush.xpose.msra.mxu0 0.0
        %710 = vmatpush.xpose.msra.mxu0 0.0
        %711 = vmatpush.xpose.msra.mxu0 0.0
        %712 = vmatpush.xpose.msra.mxu0 0.0
        %713 = vmatpush.xpose.msra.mxu0 0.0
        %714 = vmatpush.xpose.msra.mxu0 0.0
        %715 = vmatpush.xpose.msra.mxu0 0.0
        %716 = vmatpush.xpose.msra.mxu0 0.0
        %717 = vmatpush.xpose.msra.mxu0 0.0
        %718 = vmatpush.xpose.msra.mxu0 %v701
        %719 = vmatmul.f32.gmra.mxu0 %v699
        %v720 = vpop.f32.mrf.mxu0
        %v721 = vadd.f32 %v446, %v720
        %722 = vdwg.mxu0
        %724 = vrot.lane.b32.xlu0 %v637, 112
        %v725 = vpop.permute.xlu0 %724
        %v727 = vsel %vm641, %v602, 0
        %v729 = vsel %vm641, %v725, 0
        %731 = vmatpush.xpose.msra.mxu0 0.0
        %732 = vmatpush.xpose.msra.mxu0 0.0
        %733 = vmatpush.xpose.msra.mxu0 0.0
        %734 = vmatpush.xpose.msra.mxu0 0.0
        %735 = vmatpush.xpose.msra.mxu0 0.0
        %736 = vmatpush.xpose.msra.mxu0 0.0
        %737 = vmatpush.xpose.msra.mxu0 0.0
        %738 = vmatpush.xpose.msra.mxu0 0.0
        %739 = vmatpush.xpose.msra.mxu0 0.0
        %740 = vmatpush.xpose.msra.mxu0 0.0
        %741 = vmatpush.xpose.msra.mxu0 0.0
        %742 = vmatpush.xpose.msra.mxu0 0.0
        %743 = vmatpush.xpose.msra.mxu0 0.0
        %744 = vmatpush.xpose.msra.mxu0 0.0
        %745 = vmatpush.xpose.msra.mxu0 0.0
        %746 = vmatpush.xpose.msra.mxu0 %v729
        %747 = vmatmul.f32.gmra.mxu0 %v727
        %v748 = vpop.f32.mrf.mxu0
        %v749 = vadd.f32 %v446, %v748
        %750 = vdwg.mxu0
        %v751 = vsel %vm641, %v665, -inf
        %752 = vmax.xlane.f32.xlu0 %v751
        %v753 = vpop.xlane.xlu0 %752
        %v754 = vsel %vm641, %v693, -inf
        %755 = vmax.xlane.f32.xlu0 %v754
        %v756 = vpop.xlane.xlu0 %755
        %v757 = vsel %vm641, %v721, -inf
        %758 = vmax.xlane.f32.xlu0 %v757
        %v759 = vpop.xlane.xlu0 %758
        %v760 = vsel %vm641, %v749, -inf
        %761 = vmax.xlane.f32.xlu0 %v760
        %v762 = vpop.xlane.xlu0 %761
        %v763 = vsub.f32 %v665, %v753
        %v764 = vsub.f32 %v693, %v756
        %v765 = vsub.f32 %v721, %v759
        %v766 = vsub.f32 %v749, %v762
        %v767 = vmul.f32 %v763, 1.442695
        %v768 = vpow.pop %v767
        %v769 = vmul.f32 %v764, 1.442695
        %v770 = vpow.pop %v769
        %v771 = vmul.f32 %v765, 1.442695
        %v772 = vpow.pop %v771
        %v773 = vmul.f32 %v766, 1.442695
        %v774 = vpow.pop %v773
        %v775 = vsel %vm641, %v768, 0.0
        %776 = vadd.xlane.f32.xlu0 %v775
        %v777 = vpop.xlane.xlu0 %776
        %v778 = vsel %vm641, %v770, 0.0
        %779 = vadd.xlane.f32.xlu0 %v778
        %v780 = vpop.xlane.xlu0 %779
        %v781 = vsel %vm641, %v772, 0.0
        %782 = vadd.xlane.f32.xlu0 %v781
        %v783 = vpop.xlane.xlu0 %782
        %v784 = vsel %vm641, %v774, 0.0
        %785 = vadd.xlane.f32.xlu0 %v784
        %v786 = vpop.xlane.xlu0 %785
        %v787 = vrcp.pop %v777
        %v788 = vrcp.pop %v780
        %v789 = vrcp.pop %v783
        %v790 = vrcp.pop %v786
        %v791 = vmul.f32 %v768, %v787
        %v792 = vmul.f32 %v770, %v788
        %v793 = vmul.f32 %v772, %v789
        %v794 = vmul.f32 %v774, %v790
        %796 = vrot.lane.b32.xlu0 %v509, 96
        %v797 = vpop.permute.xlu0 %796
        %v800 = vsel %vm641, %v791, 0
        %802 = vmatpush.msra.mxu0 0.0
        %803 = vmatpush.msra.mxu0 0.0
        %804 = vmatpush.msra.mxu0 0.0
        %805 = vmatpush.msra.mxu0 0.0
        %806 = vmatpush.msra.mxu0 0.0
        %807 = vmatpush.msra.mxu0 0.0
        %808 = vmatpush.msra.mxu0 0.0
        %809 = vmatpush.msra.mxu0 0.0
        %810 = vmatpush.msra.mxu0 0.0
        %811 = vmatpush.msra.mxu0 0.0
        %812 = vmatpush.msra.mxu0 0.0
        %813 = vmatpush.msra.mxu0 0.0
        %814 = vmatpush.msra.mxu0 0.0
        %815 = vmatpush.msra.mxu0 0.0
        %816 = vmatpush.msra.mxu0 0.0
        %817 = vmatpush.msra.mxu0 %v797
        %818 = vmatmul.f32.gmra.mxu0 %v800
        %v819 = vpop.f32.mrf.mxu0
        %v820 = vadd.f32 0.0, %v819
        %821 = vdwg.mxu0
        %823 = vrot.lane.b32.xlu0 %v529, 96
        %v824 = vpop.permute.xlu0 %823
        %v827 = vsel %vm641, %v792, 0
        %829 = vmatpush.msra.mxu0 0.0
        %830 = vmatpush.msra.mxu0 0.0
        %831 = vmatpush.msra.mxu0 0.0
        %832 = vmatpush.msra.mxu0 0.0
        %833 = vmatpush.msra.mxu0 0.0
        %834 = vmatpush.msra.mxu0 0.0
        %835 = vmatpush.msra.mxu0 0.0
        %836 = vmatpush.msra.mxu0 0.0
        %837 = vmatpush.msra.mxu0 0.0
        %838 = vmatpush.msra.mxu0 0.0
        %839 = vmatpush.msra.mxu0 0.0
        %840 = vmatpush.msra.mxu0 0.0
        %841 = vmatpush.msra.mxu0 0.0
        %842 = vmatpush.msra.mxu0 0.0
        %843 = vmatpush.msra.mxu0 0.0
        %844 = vmatpush.msra.mxu0 %v824
        %845 = vmatmul.f32.gmra.mxu0 %v827
        %v846 = vpop.f32.mrf.mxu0
        %v847 = vadd.f32 0.0, %v846
        %848 = vdwg.mxu0
        %850 = vrot.lane.b32.xlu0 %v549, 96
        %v851 = vpop.permute.xlu0 %850
        %v854 = vsel %vm641, %v793, 0
        %856 = vmatpush.msra.mxu0 0.0
        %857 = vmatpush.msra.mxu0 0.0
        %858 = vmatpush.msra.mxu0 0.0
        %859 = vmatpush.msra.mxu0 0.0
        %860 = vmatpush.msra.mxu0 0.0
        %861 = vmatpush.msra.mxu0 0.0
        %862 = vmatpush.msra.mxu0 0.0
        %863 = vmatpush.msra.mxu0 0.0
        %864 = vmatpush.msra.mxu0 0.0
        %865 = vmatpush.msra.mxu0 0.0
        %866 = vmatpush.msra.mxu0 0.0
        %867 = vmatpush.msra.mxu0 0.0
        %868 = vmatpush.msra.mxu0 0.0
        %869 = vmatpush.msra.mxu0 0.0
        %870 = vmatpush.msra.mxu0 0.0
        %871 = vmatpush.msra.mxu0 %v851
        %872 = vmatmul.f32.gmra.mxu0 %v854
        %v873 = vpop.f32.mrf.mxu0
        %v874 = vadd.f32 0.0, %v873
        %875 = vdwg.mxu0
        %877 = vrot.lane.b32.xlu0 %v569, 96
        %v878 = vpop.permute.xlu0 %877
        %v881 = vsel %vm641, %v794, 0
        %883 = vmatpush.msra.mxu0 0.0
        %884 = vmatpush.msra.mxu0 0.0
        %885 = vmatpush.msra.mxu0 0.0
        %886 = vmatpush.msra.mxu0 0.0
        %887 = vmatpush.msra.mxu0 0.0
        %888 = vmatpush.msra.mxu0 0.0
        %889 = vmatpush.msra.mxu0 0.0
        %890 = vmatpush.msra.mxu0 0.0
        %891 = vmatpush.msra.mxu0 0.0
        %892 = vmatpush.msra.mxu0 0.0
        %893 = vmatpush.msra.mxu0 0.0
        %894 = vmatpush.msra.mxu0 0.0
        %895 = vmatpush.msra.mxu0 0.0
        %896 = vmatpush.msra.mxu0 0.0
        %897 = vmatpush.msra.mxu0 0.0
        %898 = vmatpush.msra.mxu0 %v878
        %899 = vmatmul.f32.gmra.mxu0 %v881
        %v900 = vpop.f32.mrf.mxu0
        %v901 = vadd.f32 0.0, %v900
        %902 = vdwg.mxu0
        %v903 = vld [vmem:[%s5] sm:$0xff]
        %v904 = vld [vmem:[%s5 + $0x8] sm:$0xff]
        %v905 = vld [vmem:[%s5 + $0x10] sm:$0xff]
        %v906 = vld [vmem:[%s5 + $0x18] sm:$0xff]
        %v908 = vsel %vm641, %v820, 0
        %910 = vmatpush.msra.mxu0 0.0
        %911 = vmatpush.msra.mxu0 0.0
        %912 = vmatpush.msra.mxu0 0.0
        %913 = vmatpush.msra.mxu0 0.0
        %914 = vmatpush.msra.mxu0 0.0
        %915 = vmatpush.msra.mxu0 0.0
        %916 = vmatpush.msra.mxu0 0.0
        %917 = vmatpush.msra.mxu0 0.0
        %918 = vmatpush.msra.mxu0 0.0
        %919 = vmatpush.msra.mxu0 0.0
        %920 = vmatpush.msra.mxu0 0.0
        %921 = vmatpush.msra.mxu0 0.0
        %922 = vmatpush.msra.mxu0 0.0
        %923 = vmatpush.msra.mxu0 0.0
        %924 = vmatpush.msra.mxu0 0.0
        %925 = vmatpush.msra.mxu0 %v903
        %926 = vmatmul.f32.gmra.mxu0 %v908
        %v927 = vpop.f32.mrf.mxu0
        %v928 = vadd.f32 0.0, %v927
        %929 = vdwg.mxu0
        %v931 = vsel %vm641, %v847, 0
        %933 = vmatpush.msra.mxu0 0.0
        %934 = vmatpush.msra.mxu0 0.0
        %935 = vmatpush.msra.mxu0 0.0
        %936 = vmatpush.msra.mxu0 0.0
        %937 = vmatpush.msra.mxu0 0.0
        %938 = vmatpush.msra.mxu0 0.0
        %939 = vmatpush.msra.mxu0 0.0
        %940 = vmatpush.msra.mxu0 0.0
        %941 = vmatpush.msra.mxu0 0.0
        %942 = vmatpush.msra.mxu0 0.0
        %943 = vmatpush.msra.mxu0 0.0
        %944 = vmatpush.msra.mxu0 0.0
        %945 = vmatpush.msra.mxu0 0.0
        %946 = vmatpush.msra.mxu0 0.0
        %947 = vmatpush.msra.mxu0 0.0
        %948 = vmatpush.msra.mxu0 %v904
        %949 = vmatmul.f32.gmra.mxu0 %v931
        %v950 = vpop.f32.mrf.mxu0
        %v951 = vadd.f32 0.0, %v950
        %952 = vdwg.mxu0
        %v954 = vsel %vm641, %v874, 0
        %956 = vmatpush.msra.mxu0 0.0
        %957 = vmatpush.msra.mxu0 0.0
        %958 = vmatpush.msra.mxu0 0.0
        %959 = vmatpush.msra.mxu0 0.0
        %960 = vmatpush.msra.mxu0 0.0
        %961 = vmatpush.msra.mxu0 0.0
        %962 = vmatpush.msra.mxu0 0.0
        %963 = vmatpush.msra.mxu0 0.0
        %964 = vmatpush.msra.mxu0 0.0
        %965 = vmatpush.msra.mxu0 0.0
        %966 = vmatpush.msra.mxu0 0.0
        %967 = vmatpush.msra.mxu0 0.0
        %968 = vmatpush.msra.mxu0 0.0
        %969 = vmatpush.msra.mxu0 0.0
        %970 = vmatpush.msra.mxu0 0.0
        %971 = vmatpush.msra.mxu0 %v905
        %972 = vmatmul.f32.gmra.mxu0 %v954
        %v973 = vpop.f32.mrf.mxu0
        %v974 = vadd.f32 0.0, %v973
        %975 = vdwg.mxu0
        %v977 = vsel %vm641, %v901, 0
        %979 = vmatpush.msra.mxu0 0.0
        %980 = vmatpush.msra.mxu0 0.0
        %981 = vmatpush.msra.mxu0 0.0
        %982 = vmatpush.msra.mxu0 0.0
        %983 = vmatpush.msra.mxu0 0.0
        %984 = vmatpush.msra.mxu0 0.0
        %985 = vmatpush.msra.mxu0 0.0
        %986 = vmatpush.msra.mxu0 0.0
        %987 = vmatpush.msra.mxu0 0.0
        %988 = vmatpush.msra.mxu0 0.0
        %989 = vmatpush.msra.mxu0 0.0
        %990 = vmatpush.msra.mxu0 0.0
        %991 = vmatpush.msra.mxu0 0.0
        %992 = vmatpush.msra.mxu0 0.0
        %993 = vmatpush.msra.mxu0 0.0
        %994 = vmatpush.msra.mxu0 %v906
        %995 = vmatmul.f32.gmra.mxu0 %v977
        %v996 = vpop.f32.mrf.mxu0
        %v997 = vadd.f32 0.0, %v996
        %998 = vdwg.mxu0
        %v999 = vsel %vm448, %v928, 0.0
        %v1000 = vsel %vm448, %v951, 0.0
        %v1001 = vadd.f32 %v999, %v1000
        %v1002 = vsel %vm448, %v974, 0.0
        %v1003 = vadd.f32 %v1001, %v1002
        %v1004 = vsel %vm448, %v997, 0.0
        %v1005 = vadd.f32 %v1003, %v1004
        %v1006 = vadd.f32 %v439, %v1005
        %v1007 = vmul.f32 %v1006, %v1006
        %v1008 = vsel %vm448, %v1007, 0.0
        %1009 = vadd.xlane.f32.xlu0 %v1008
        %v1010 = vpop.xlane.xlu0 %1009
        %v1011 = vmul.f32 %v1010, %v458
        %v1012 = vadd.f32 %v1011, 1e-05
        %v1013 = vrsqrt.pop %v1012
        %v1014 = vmul.f32 %v1013, %v1012
        %v1015 = vmul.f32 %v1014, %v1013
        %v1016 = vmul.f32 0.5, %v1015
        %v1017 = vsub.f32 1.5, %v1016
        %v1018 = vmul.f32 %v1013, %v1017
        %vm1019 = vweird.f32 %v1012
        %vm1020 = vweird.f32 %v1013
        %vm1021 = vmor %vm1019, %vm1020
        %v1022 = vsel %vm1021, %v1013, %v1018
        %v1023 = vmul.f32 %v1006, %v1022
        %v1024 = vld [vmem:[%s6] sm:$0xff]
        %v1025 = vld [vmem:[%s6 + $0x8] sm:$0xff]
        %v1026 = vld [vmem:[%s6 + $0x10] sm:$0xff]
        %v1027 = vld [vmem:[%s6 + $0x18] sm:$0xff]
        %v1029 = vsel %vm448, %v1023, 0
        %1031 = vmatpush.msra.mxu0 0.0
        %1032 = vmatpush.msra.mxu0 0.0
        %1033 = vmatpush.msra.mxu0 0.0
        %1034 = vmatpush.msra.mxu0 0.0
        %1035 = vmatpush.msra.mxu0 0.0
        %1036 = vmatpush.msra.mxu0 0.0
        %1037 = vmatpush.msra.mxu0 0.0
        %1038 = vmatpush.msra.mxu0 0.0
        %1039 = vmatpush.msra.mxu0 0.0
        %1040 = vmatpush.msra.mxu0 0.0
        %1041 = vmatpush.msra.mxu0 0.0
        %1042 = vmatpush.msra.mxu0 0.0
        %1043 = vmatpush.msra.mxu0 %v1027
        %1044 = vmatpush.msra.mxu0 %v1026
        %1045 = vmatpush.msra.mxu0 %v1025
        %1046 = vmatpush.msra.mxu0 %v1024
        %1047 = vmatmul.f32.gmra.mxu0 %v1029
        %v1048 = vpop.f32.mrf.mxu0
        %v1049 = vadd.f32 0.0, %v1048
        %1050 = vdwg.mxu0
        %v1051 = vxor.u32 %v1049, 2147483648
        %v1052 = vmul.f32 %v1051, 1.442695
        %v1053 = vpow.pop %v1052
        %v1054 = vadd.f32 %v1053, 1.0
        %v1055 = vrcp.pop %v1054
        %v1056 = vmul.f32 %v1054, %v1055
        %v1057 = vsub.f32 1.0, %v1056
        %v1058 = vmul.f32 %v1055, %v1057
        %v1059 = vadd.f32 %v1055, %v1058
        %vm1060 = vweird.f32 %v1054
        %vm1061 = vweird.f32 %v1055
        %vm1062 = vmor %vm1060, %vm1061
        %v1063 = vsel %vm1062, %v1055, %v1059
        %v1064 = vand.u32 2147483647, %v1054
        %vm1065 = vcmp.eq.f32.partialorder %v1064, 8.507059e+37
        %v1066 = vand.u32 %v1054, 2147483648
        %v1067 = vor.u32 1.1754944e-38, %v1066
        %v1068 = vsel %vm1065, %v1067, %v1063
        %v1069 = vmul.f32 1.0, %v1068
        %v1070 = vmul.f32 %v1049, %v1069
        %1072 = vrot.lane.b32.xlu0 %v1049, 64
        %v1073 = vpop.permute.xlu0 %1072
        %v1075 = vmul.f32 %v1070, %v1073
        %v1076 = vld [vmem:[%s7] sm:$0xff]
        %v1077 = vld [vmem:[%s7 + $0x8] sm:$0xff]
        %v1078 = vld [vmem:[%s7 + $0x10] sm:$0xff]
        %v1079 = vld [vmem:[%s7 + $0x18] sm:$0xff]
        %v1080 = vld [vmem:[%s7 + $0x20] sm:$0xff]
        %v1081 = vld [vmem:[%s7 + $0x28] sm:$0xff]
        %v1082 = vld [vmem:[%s7 + $0x30] sm:$0xff]
        %v1083 = vld [vmem:[%s7 + $0x38] sm:$0xff]
        %v1085 = vsel %vm417, %v1075, 0
        %1087 = vmatpush.msra.mxu0 0.0
        %1088 = vmatpush.msra.mxu0 0.0
        %1089 = vmatpush.msra.mxu0 0.0
        %1090 = vmatpush.msra.mxu0 0.0
        %1091 = vmatpush.msra.mxu0 0.0
        %1092 = vmatpush.msra.mxu0 0.0
        %1093 = vmatpush.msra.mxu0 0.0
        %1094 = vmatpush.msra.mxu0 0.0
        %1095 = vmatpush.msra.mxu0 %v1083
        %1096 = vmatpush.msra.mxu0 %v1082
        %1097 = vmatpush.msra.mxu0 %v1081
        %1098 = vmatpush.msra.mxu0 %v1080
        %1099 = vmatpush.msra.mxu0 %v1079
        %1100 = vmatpush.msra.mxu0 %v1078
        %1101 = vmatpush.msra.mxu0 %v1077
        %1102 = vmatpush.msra.mxu0 %v1076
        %1103 = vmatmul.f32.gmra.mxu0 %v1085
        %v1104 = vpop.f32.mrf.mxu0
        %v1105 = vadd.f32 0.0, %v1104
        %1106 = vdwg.mxu0
        %v1107 = vadd.f32 %v1006, %v1105
        %v1108 = vmul.f32 %v1107, %v1107
        %v1109 = vsel %vm448, %v1108, 0.0
        %1110 = vadd.xlane.f32.xlu0 %v1109
        %v1111 = vpop.xlane.xlu0 %1110
        %v1112 = vmul.f32 %v1111, %v458
        %v1113 = vadd.f32 %v1112, 1e-05
        %v1114 = vrsqrt.pop %v1113
        %v1115 = vmul.f32 %v1114, %v1113
        %v1116 = vmul.f32 %v1115, %v1114
        %v1117 = vmul.f32 0.5, %v1116
        %v1118 = vsub.f32 1.5, %v1117
        %v1119 = vmul.f32 %v1114, %v1118
        %vm1120 = vweird.f32 %v1113
        %vm1121 = vweird.f32 %v1114
        %vm1122 = vmor %vm1120, %vm1121
        %v1123 = vsel %vm1122, %v1114, %v1119
        %v1124 = vmul.f32 %v1107, %v1123
        %s1125 = scalar_lea.vmem [#allocation2], 128
        %v1126 = vld [vmem:[%s1125] sm:$0xff]
        %v1127 = vld [vmem:[%s1125 + $0x8] sm:$0xff]
        %v1128 = vld [vmem:[%s1125 + $0x10] sm:$0xff]
        %v1129 = vld [vmem:[%s1125 + $0x18] sm:$0xff]
        %v1130 = vld [vmem:[%s1125 + $0x20] sm:$0xff]
        %v1131 = vld [vmem:[%s1125 + $0x28] sm:$0xff]
        %v1132 = vld [vmem:[%s1125 + $0x30] sm:$0xff]
        %v1133 = vld [vmem:[%s1125 + $0x38] sm:$0xff]
        %v1134 = vld [vmem:[%s1125 + $0x40] sm:$0xff]
        %v1135 = vld [vmem:[%s1125 + $0x48] sm:$0xff]
        %v1136 = vld [vmem:[%s1125 + $0x50] sm:$0xff]
        %v1137 = vld [vmem:[%s1125 + $0x58] sm:$0xff]
        %v1138 = vld [vmem:[%s1125 + $0x60] sm:$0xff]
        %v1139 = vld [vmem:[%s1125 + $0x68] sm:$0xff]
        %v1140 = vld [vmem:[%s1125 + $0x70] sm:$0xff]
        %v1141 = vld [vmem:[%s1125 + $0x78] sm:$0xff]
        %v1143 = vsel %vm448, %v1124, 0
        %1145 = vmatpush.msra.mxu0 0.0
        %1146 = vmatpush.msra.mxu0 0.0
        %1147 = vmatpush.msra.mxu0 0.0
        %1148 = vmatpush.msra.mxu0 0.0
        %1149 = vmatpush.msra.mxu0 0.0
        %1150 = vmatpush.msra.mxu0 0.0
        %1151 = vmatpush.msra.mxu0 0.0
        %1152 = vmatpush.msra.mxu0 0.0
        %1153 = vmatpush.msra.mxu0 0.0
        %1154 = vmatpush.msra.mxu0 0.0
        %1155 = vmatpush.msra.mxu0 0.0
        %1156 = vmatpush.msra.mxu0 0.0
        %1157 = vmatpush.msra.mxu0 %v1129
        %1158 = vmatpush.msra.mxu0 %v1128
        %1159 = vmatpush.msra.mxu0 %v1127
        %1160 = vmatpush.msra.mxu0 %v1126
        %1161 = vmatmul.f32.gmra.mxu0 %v1143
        %v1162 = vpop.f32.mrf.mxu0
        %v1163 = vadd.f32 0.0, %v1162
        %1164 = vdwg.mxu0
        %1165 = vmatpush.msra.mxu0 0.0
        %1166 = vmatpush.msra.mxu0 0.0
        %1167 = vmatpush.msra.mxu0 0.0
        %1168 = vmatpush.msra.mxu0 0.0
        %1169 = vmatpush.msra.mxu0 0.0
        %1170 = vmatpush.msra.mxu0 0.0
        %1171 = vmatpush.msra.mxu0 0.0
        %1172 = vmatpush.msra.mxu0 0.0
        %1173 = vmatpush.msra.mxu0 0.0
        %1174 = vmatpush.msra.mxu0 0.0
        %1175 = vmatpush.msra.mxu0 0.0
        %1176 = vmatpush.msra.mxu0 0.0
        %1177 = vmatpush.msra.mxu0 %v1133
        %1178 = vmatpush.msra.mxu0 %v1132
        %1179 = vmatpush.msra.mxu0 %v1131
        %1180 = vmatpush.msra.mxu0 %v1130
        %1181 = vmatmul.f32.gmra.mxu0 %v1143
        %v1182 = vpop.f32.mrf.mxu0
        %v1183 = vadd.f32 0.0, %v1182
        %1184 = vdwg.mxu0
        %1185 = vmatpush.msra.mxu0 0.0
        %1186 = vmatpush.msra.mxu0 0.0
        %1187 = vmatpush.msra.mxu0 0.0
        %1188 = vmatpush.msra.mxu0 0.0
        %1189 = vmatpush.msra.mxu0 0.0
        %1190 = vmatpush.msra.mxu0 0.0
        %1191 = vmatpush.msra.mxu0 0.0
        %1192 = vmatpush.msra.mxu0 0.0
        %1193 = vmatpush.msra.mxu0 0.0
        %1194 = vmatpush.msra.mxu0 0.0
        %1195 = vmatpush.msra.mxu0 0.0
        %1196 = vmatpush.msra.mxu0 0.0
        %1197 = vmatpush.msra.mxu0 %v1137
        %1198 = vmatpush.msra.mxu0 %v1136
        %1199 = vmatpush.msra.mxu0 %v1135
        %1200 = vmatpush.msra.mxu0 %v1134
        %1201 = vmatmul.f32.gmra.mxu0 %v1143
        %v1202 = vpop.f32.mrf.mxu0
        %v1203 = vadd.f32 0.0, %v1202
        %1204 = vdwg.mxu0
        %1205 = vmatpush.msra.mxu0 0.0
        %1206 = vmatpush.msra.mxu0 0.0
        %1207 = vmatpush.msra.mxu0 0.0
        %1208 = vmatpush.msra.mxu0 0.0
        %1209 = vmatpush.msra.mxu0 0.0
        %1210 = vmatpush.msra.mxu0 0.0
        %1211 = vmatpush.msra.mxu0 0.0
        %1212 = vmatpush.msra.mxu0 0.0
        %1213 = vmatpush.msra.mxu0 0.0
        %1214 = vmatpush.msra.mxu0 0.0
        %1215 = vmatpush.msra.mxu0 0.0
        %1216 = vmatpush.msra.mxu0 0.0
        %1217 = vmatpush.msra.mxu0 %v1141
        %1218 = vmatpush.msra.mxu0 %v1140
        %1219 = vmatpush.msra.mxu0 %v1139
        %1220 = vmatpush.msra.mxu0 %v1138
        %1221 = vmatmul.f32.gmra.mxu0 %v1143
        %v1222 = vpop.f32.mrf.mxu0
        %v1223 = vadd.f32 0.0, %v1222
        %1224 = vdwg.mxu0
        %v1225 = vmul.f32 %v1163, %v441
        %v1226 = vmul.f32 %v1183, %v441
        %v1227 = vmul.f32 %v1203, %v441
        %v1228 = vmul.f32 %v1223, %v441
        %v1229 = vmul.f32 %v1163, %v577
        %v1230 = vmul.f32 %v1183, %v577
        %v1231 = vmul.f32 %v1203, %v577
        %v1232 = vmul.f32 %v1223, %v577
        %1237 = vrot.lane.b32.xlu0 %v1229, 120
        %v1238 = vpop.permute.xlu0 %1237
        %1239 = vrot.lane.b32.xlu0 %v1230, 120
        %v1240 = vpop.permute.xlu0 %1239
        %1241 = vrot.lane.b32.xlu0 %v1231, 120
        %v1242 = vpop.permute.xlu0 %1241
        %1243 = vrot.lane.b32.xlu0 %v1232, 120
        %v1244 = vpop.permute.xlu0 %1243
        %v1249 = vadd.f32 %v1225, %v1238
        %v1250 = vadd.f32 %v1226, %v1240
        %v1251 = vadd.f32 %v1227, %v1242
        %v1252 = vadd.f32 %v1228, %v1244
        %v1253 = vmul.f32 %v1163, %v605
        %v1254 = vmul.f32 %v1183, %v605
        %v1255 = vmul.f32 %v1203, %v605
        %v1256 = vmul.f32 %v1223, %v605
        %v1257 = vmul.f32 %v1163, %v612
        %v1258 = vmul.f32 %v1183, %v612
        %v1259 = vmul.f32 %v1203, %v612
        %v1260 = vmul.f32 %v1223, %v612
        %1265 = vrot.lane.b32.xlu0 %v1257, 120
        %v1266 = vpop.permute.xlu0 %1265
        %1267 = vrot.lane.b32.xlu0 %v1258, 120
        %v1268 = vpop.permute.xlu0 %1267
        %1269 = vrot.lane.b32.xlu0 %v1259, 120
        %v1270 = vpop.permute.xlu0 %1269
        %1271 = vrot.lane.b32.xlu0 %v1260, 120
        %v1272 = vpop.permute.xlu0 %1271
        %v1277 = vadd.f32 %v1253, %v1266
        %v1278 = vadd.f32 %v1254, %v1268
        %v1279 = vadd.f32 %v1255, %v1270
        %v1280 = vadd.f32 %v1256, %v1272
        %1282 = vrot.lane.b32.xlu0 %v1277, 112
        %v1283 = vpop.permute.xlu0 %1282
        %v1285 = vsel %vm641, %v1249, 0
        %v1287 = vsel %vm641, %v1283, 0
        %1289 = vmatpush.xpose.msra.mxu0 0.0
        %1290 = vmatpush.xpose.msra.mxu0 0.0
        %1291 = vmatpush.xpose.msra.mxu0 0.0
        %1292 = vmatpush.xpose.msra.mxu0 0.0
        %1293 = vmatpush.xpose.msra.mxu0 0.0
        %1294 = vmatpush.xpose.msra.mxu0 0.0
        %1295 = vmatpush.xpose.msra.mxu0 0.0
        %1296 = vmatpush.xpose.msra.mxu0 0.0
        %1297 = vmatpush.xpose.msra.mxu0 0.0
        %1298 = vmatpush.xpose.msra.mxu0 0.0
        %1299 = vmatpush.xpose.msra.mxu0 0.0
        %1300 = vmatpush.xpose.msra.mxu0 0.0
        %1301 = vmatpush.xpose.msra.mxu0 0.0
        %1302 = vmatpush.xpose.msra.mxu0 0.0
        %1303 = vmatpush.xpose.msra.mxu0 0.0
        %1304 = vmatpush.xpose.msra.mxu0 %v1287
        %1305 = vmatmul.f32.gmra.mxu0 %v1285
        %v1306 = vpop.f32.mrf.mxu0
        %v1307 = vadd.f32 %v446, %v1306
        %1308 = vdwg.mxu0
        %1310 = vrot.lane.b32.xlu0 %v1278, 112
        %v1311 = vpop.permute.xlu0 %1310
        %v1313 = vsel %vm641, %v1250, 0
        %v1315 = vsel %vm641, %v1311, 0
        %1317 = vmatpush.xpose.msra.mxu0 0.0
        %1318 = vmatpush.xpose.msra.mxu0 0.0
        %1319 = vmatpush.xpose.msra.mxu0 0.0
        %1320 = vmatpush.xpose.msra.mxu0 0.0
        %1321 = vmatpush.xpose.msra.mxu0 0.0
        %1322 = vmatpush.xpose.msra.mxu0 0.0
        %1323 = vmatpush.xpose.msra.mxu0 0.0
        %1324 = vmatpush.xpose.msra.mxu0 0.0
        %1325 = vmatpush.xpose.msra.mxu0 0.0
        %1326 = vmatpush.xpose.msra.mxu0 0.0
        %1327 = vmatpush.xpose.msra.mxu0 0.0
        %1328 = vmatpush.xpose.msra.mxu0 0.0
        %1329 = vmatpush.xpose.msra.mxu0 0.0
        %1330 = vmatpush.xpose.msra.mxu0 0.0
        %1331 = vmatpush.xpose.msra.mxu0 0.0
        %1332 = vmatpush.xpose.msra.mxu0 %v1315
        %1333 = vmatmul.f32.gmra.mxu0 %v1313
        %v1334 = vpop.f32.mrf.mxu0
        %v1335 = vadd.f32 %v446, %v1334
        %1336 = vdwg.mxu0
        %1338 = vrot.lane.b32.xlu0 %v1279, 112
        %v1339 = vpop.permute.xlu0 %1338
        %v1341 = vsel %vm641, %v1251, 0
        %v1343 = vsel %vm641, %v1339, 0
        %1345 = vmatpush.xpose.msra.mxu0 0.0
        %1346 = vmatpush.xpose.msra.mxu0 0.0
        %1347 = vmatpush.xpose.msra.mxu0 0.0
        %1348 = vmatpush.xpose.msra.mxu0 0.0
        %1349 = vmatpush.xpose.msra.mxu0 0.0
        %1350 = vmatpush.xpose.msra.mxu0 0.0
        %1351 = vmatpush.xpose.msra.mxu0 0.0
        %1352 = vmatpush.xpose.msra.mxu0 0.0
        %1353 = vmatpush.xpose.msra.mxu0 0.0
        %1354 = vmatpush.xpose.msra.mxu0 0.0
        %1355 = vmatpush.xpose.msra.mxu0 0.0
        %1356 = vmatpush.xpose.msra.mxu0 0.0
        %1357 = vmatpush.xpose.msra.mxu0 0.0
        %1358 = vmatpush.xpose.msra.mxu0 0.0
        %1359 = vmatpush.xpose.msra.mxu0 0.0
        %1360 = vmatpush.xpose.msra.mxu0 %v1343
        %1361 = vmatmul.f32.gmra.mxu0 %v1341
        %v1362 = vpop.f32.mrf.mxu0
        %v1363 = vadd.f32 %v446, %v1362
        %1364 = vdwg.mxu0
        %1366 = vrot.lane.b32.xlu0 %v1280, 112
        %v1367 = vpop.permute.xlu0 %1366
        %v1369 = vsel %vm641, %v1252, 0
        %v1371 = vsel %vm641, %v1367, 0
        %1373 = vmatpush.xpose.msra.mxu0 0.0
        %1374 = vmatpush.xpose.msra.mxu0 0.0
        %1375 = vmatpush.xpose.msra.mxu0 0.0
        %1376 = vmatpush.xpose.msra.mxu0 0.0
        %1377 = vmatpush.xpose.msra.mxu0 0.0
        %1378 = vmatpush.xpose.msra.mxu0 0.0
        %1379 = vmatpush.xpose.msra.mxu0 0.0
        %1380 = vmatpush.xpose.msra.mxu0 0.0
        %1381 = vmatpush.xpose.msra.mxu0 0.0
        %1382 = vmatpush.xpose.msra.mxu0 0.0
        %1383 = vmatpush.xpose.msra.mxu0 0.0
        %1384 = vmatpush.xpose.msra.mxu0 0.0
        %1385 = vmatpush.xpose.msra.mxu0 0.0
        %1386 = vmatpush.xpose.msra.mxu0 0.0
        %1387 = vmatpush.xpose.msra.mxu0 0.0
        %1388 = vmatpush.xpose.msra.mxu0 %v1371
        %1389 = vmatmul.f32.gmra.mxu0 %v1369
        %v1390 = vpop.f32.mrf.mxu0
        %v1391 = vadd.f32 %v446, %v1390
        %1392 = vdwg.mxu0
        %v1393 = vsel %vm641, %v1307, -inf
        %1394 = vmax.xlane.f32.xlu0 %v1393
        %v1395 = vpop.xlane.xlu0 %1394
        %v1396 = vsel %vm641, %v1335, -inf
        %1397 = vmax.xlane.f32.xlu0 %v1396
        %v1398 = vpop.xlane.xlu0 %1397
        %v1399 = vsel %vm641, %v1363, -inf
        %1400 = vmax.xlane.f32.xlu0 %v1399
        %v1401 = vpop.xlane.xlu0 %1400
        %v1402 = vsel %vm641, %v1391, -inf
        %1403 = vmax.xlane.f32.xlu0 %v1402
        %v1404 = vpop.xlane.xlu0 %1403
        %v1405 = vsub.f32 %v1307, %v1395
        %v1406 = vsub.f32 %v1335, %v1398
        %v1407 = vsub.f32 %v1363, %v1401
        %v1408 = vsub.f32 %v1391, %v1404
        %v1409 = vmul.f32 %v1405, 1.442695
        %v1410 = vpow.pop %v1409
        %v1411 = vmul.f32 %v1406, 1.442695
        %v1412 = vpow.pop %v1411
        %v1413 = vmul.f32 %v1407, 1.442695
        %v1414 = vpow.pop %v1413
        %v1415 = vmul.f32 %v1408, 1.442695
        %v1416 = vpow.pop %v1415
        %v1417 = vsel %vm641, %v1410, 0.0
        %1418 = vadd.xlane.f32.xlu0 %v1417
        %v1419 = vpop.xlane.xlu0 %1418
        %v1420 = vsel %vm641, %v1412, 0.0
        %1421 = vadd.xlane.f32.xlu0 %v1420
        %v1422 = vpop.xlane.xlu0 %1421
        %v1423 = vsel %vm641, %v1414, 0.0
        %1424 = vadd.xlane.f32.xlu0 %v1423
        %v1425 = vpop.xlane.xlu0 %1424
        %v1426 = vsel %vm641, %v1416, 0.0
        %1427 = vadd.xlane.f32.xlu0 %v1426
        %v1428 = vpop.xlane.xlu0 %1427
        %v1429 = vrcp.pop %v1419
        %v1430 = vrcp.pop %v1422
        %v1431 = vrcp.pop %v1425
        %v1432 = vrcp.pop %v1428
        %v1433 = vmul.f32 %v1410, %v1429
        %v1434 = vmul.f32 %v1412, %v1430
        %v1435 = vmul.f32 %v1414, %v1431
        %v1436 = vmul.f32 %v1416, %v1432
        %1438 = vrot.lane.b32.xlu0 %v1163, 96
        %v1439 = vpop.permute.xlu0 %1438
        %v1442 = vsel %vm641, %v1433, 0
        %1444 = vmatpush.msra.mxu0 0.0
        %1445 = vmatpush.msra.mxu0 0.0
        %1446 = vmatpush.msra.mxu0 0.0
        %1447 = vmatpush.msra.mxu0 0.0
        %1448 = vmatpush.msra.mxu0 0.0
        %1449 = vmatpush.msra.mxu0 0.0
        %1450 = vmatpush.msra.mxu0 0.0
        %1451 = vmatpush.msra.mxu0 0.0
        %1452 = vmatpush.msra.mxu0 0.0
        %1453 = vmatpush.msra.mxu0 0.0
        %1454 = vmatpush.msra.mxu0 0.0
        %1455 = vmatpush.msra.mxu0 0.0
        %1456 = vmatpush.msra.mxu0 0.0
        %1457 = vmatpush.msra.mxu0 0.0
        %1458 = vmatpush.msra.mxu0 0.0
        %1459 = vmatpush.msra.mxu0 %v1439
        %1460 = vmatmul.f32.gmra.mxu0 %v1442
        %v1461 = vpop.f32.mrf.mxu0
        %v1462 = vadd.f32 0.0, %v1461
        %1463 = vdwg.mxu0
        %1465 = vrot.lane.b32.xlu0 %v1183, 96
        %v1466 = vpop.permute.xlu0 %1465
        %v1469 = vsel %vm641, %v1434, 0
        %1471 = vmatpush.msra.mxu0 0.0
        %1472 = vmatpush.msra.mxu0 0.0
        %1473 = vmatpush.msra.mxu0 0.0
        %1474 = vmatpush.msra.mxu0 0.0
        %1475 = vmatpush.msra.mxu0 0.0
        %1476 = vmatpush.msra.mxu0 0.0
        %1477 = vmatpush.msra.mxu0 0.0
        %1478 = vmatpush.msra.mxu0 0.0
        %1479 = vmatpush.msra.mxu0 0.0
        %1480 = vmatpush.msra.mxu0 0.0
        %1481 = vmatpush.msra.mxu0 0.0
        %1482 = vmatpush.msra.mxu0 0.0
        %1483 = vmatpush.msra.mxu0 0.0
        %1484 = vmatpush.msra.mxu0 0.0
        %1485 = vmatpush.msra.mxu0 0.0
        %1486 = vmatpush.msra.mxu0 %v1466
        %1487 = vmatmul.f32.gmra.mxu0 %v1469
        %v1488 = vpop.f32.mrf.mxu0
        %v1489 = vadd.f32 0.0, %v1488
        %1490 = vdwg.mxu0
        %1492 = vrot.lane.b32.xlu0 %v1203, 96
        %v1493 = vpop.permute.xlu0 %1492
        %v1496 = vsel %vm641, %v1435, 0
        %1498 = vmatpush.msra.mxu0 0.0
        %1499 = vmatpush.msra.mxu0 0.0
        %1500 = vmatpush.msra.mxu0 0.0
        %1501 = vmatpush.msra.mxu0 0.0
        %1502 = vmatpush.msra.mxu0 0.0
        %1503 = vmatpush.msra.mxu0 0.0
        %1504 = vmatpush.msra.mxu0 0.0
        %1505 = vmatpush.msra.mxu0 0.0
        %1506 = vmatpush.msra.mxu0 0.0
        %1507 = vmatpush.msra.mxu0 0.0
        %1508 = vmatpush.msra.mxu0 0.0
        %1509 = vmatpush.msra.mxu0 0.0
        %1510 = vmatpush.msra.mxu0 0.0
        %1511 = vmatpush.msra.mxu0 0.0
        %1512 = vmatpush.msra.mxu0 0.0
        %1513 = vmatpush.msra.mxu0 %v1493
        %1514 = vmatmul.f32.gmra.mxu0 %v1496
        %v1515 = vpop.f32.mrf.mxu0
        %v1516 = vadd.f32 0.0, %v1515
        %1517 = vdwg.mxu0
        %1519 = vrot.lane.b32.xlu0 %v1223, 96
        %v1520 = vpop.permute.xlu0 %1519
        %v1523 = vsel %vm641, %v1436, 0
        %1525 = vmatpush.msra.mxu0 0.0
        %1526 = vmatpush.msra.mxu0 0.0
        %1527 = vmatpush.msra.mxu0 0.0
        %1528 = vmatpush.msra.mxu0 0.0
        %1529 = vmatpush.msra.mxu0 0.0
        %1530 = vmatpush.msra.mxu0 0.0
        %1531 = vmatpush.msra.mxu0 0.0
        %1532 = vmatpush.msra.mxu0 0.0
        %1533 = vmatpush.msra.mxu0 0.0
        %1534 = vmatpush.msra.mxu0 0.0
        %1535 = vmatpush.msra.mxu0 0.0
        %1536 = vmatpush.msra.mxu0 0.0
        %1537 = vmatpush.msra.mxu0 0.0
        %1538 = vmatpush.msra.mxu0 0.0
        %1539 = vmatpush.msra.mxu0 0.0
        %1540 = vmatpush.msra.mxu0 %v1520
        %1541 = vmatmul.f32.gmra.mxu0 %v1523
        %v1542 = vpop.f32.mrf.mxu0
        %v1543 = vadd.f32 0.0, %v1542
        %1544 = vdwg.mxu0
        %s1545 = scalar_lea.vmem %s5, 32
        %v1546 = vld [vmem:[%s1545] sm:$0xff]
        %v1547 = vld [vmem:[%s1545 + $0x8] sm:$0xff]
        %v1548 = vld [vmem:[%s1545 + $0x10] sm:$0xff]
        %v1549 = vld [vmem:[%s1545 + $0x18] sm:$0xff]
        %v1551 = vsel %vm641, %v1462, 0
        %1553 = vmatpush.msra.mxu0 0.0
        %1554 = vmatpush.msra.mxu0 0.0
        %1555 = vmatpush.msra.mxu0 0.0
        %1556 = vmatpush.msra.mxu0 0.0
        %1557 = vmatpush.msra.mxu0 0.0
        %1558 = vmatpush.msra.mxu0 0.0
        %1559 = vmatpush.msra.mxu0 0.0
        %1560 = vmatpush.msra.mxu0 0.0
        %1561 = vmatpush.msra.mxu0 0.0
        %1562 = vmatpush.msra.mxu0 0.0
        %1563 = vmatpush.msra.mxu0 0.0
        %1564 = vmatpush.msra.mxu0 0.0
        %1565 = vmatpush.msra.mxu0 0.0
        %1566 = vmatpush.msra.mxu0 0.0
        %1567 = vmatpush.msra.mxu0 0.0
        %1568 = vmatpush.msra.mxu0 %v1546
        %1569 = vmatmul.f32.gmra.mxu0 %v1551
        %v1570 = vpop.f32.mrf.mxu0
        %v1571 = vadd.f32 0.0, %v1570
        %1572 = vdwg.mxu0
        %v1574 = vsel %vm641, %v1489, 0
        %1576 = vmatpush.msra.mxu0 0.0
        %1577 = vmatpush.msra.mxu0 0.0
        %1578 = vmatpush.msra.mxu0 0.0
        %1579 = vmatpush.msra.mxu0 0.0
        %1580 = vmatpush.msra.mxu0 0.0
        %1581 = vmatpush.msra.mxu0 0.0
        %1582 = vmatpush.msra.mxu0 0.0
        %1583 = vmatpush.msra.mxu0 0.0
        %1584 = vmatpush.msra.mxu0 0.0
        %1585 = vmatpush.msra.mxu0 0.0
        %1586 = vmatpush.msra.mxu0 0.0
        %1587 = vmatpush.msra.mxu0 0.0
        %1588 = vmatpush.msra.mxu0 0.0
        %1589 = vmatpush.msra.mxu0 0.0
        %1590 = vmatpush.msra.mxu0 0.0
        %1591 = vmatpush.msra.mxu0 %v1547
        %1592 = vmatmul.f32.gmra.mxu0 %v1574
        %v1593 = vpop.f32.mrf.mxu0
        %v1594 = vadd.f32 0.0, %v1593
        %1595 = vdwg.mxu0
        %v1597 = vsel %vm641, %v1516, 0
        %1599 = vmatpush.msra.mxu0 0.0
        %1600 = vmatpush.msra.mxu0 0.0
        %1601 = vmatpush.msra.mxu0 0.0
        %1602 = vmatpush.msra.mxu0 0.0
        %1603 = vmatpush.msra.mxu0 0.0
        %1604 = vmatpush.msra.mxu0 0.0
        %1605 = vmatpush.msra.mxu0 0.0
        %1606 = vmatpush.msra.mxu0 0.0
        %1607 = vmatpush.msra.mxu0 0.0
        %1608 = vmatpush.msra.mxu0 0.0
        %1609 = vmatpush.msra.mxu0 0.0
        %1610 = vmatpush.msra.mxu0 0.0
        %1611 = vmatpush.msra.mxu0 0.0
        %1612 = vmatpush.msra.mxu0 0.0
        %1613 = vmatpush.msra.mxu0 0.0
        %1614 = vmatpush.msra.mxu0 %v1548
        %1615 = vmatmul.f32.gmra.mxu0 %v1597
        %v1616 = vpop.f32.mrf.mxu0
        %v1617 = vadd.f32 0.0, %v1616
        %1618 = vdwg.mxu0
        %v1620 = vsel %vm641, %v1543, 0
        %1622 = vmatpush.msra.mxu0 0.0
        %1623 = vmatpush.msra.mxu0 0.0
        %1624 = vmatpush.msra.mxu0 0.0
        %1625 = vmatpush.msra.mxu0 0.0
        %1626 = vmatpush.msra.mxu0 0.0
        %1627 = vmatpush.msra.mxu0 0.0
        %1628 = vmatpush.msra.mxu0 0.0
        %1629 = vmatpush.msra.mxu0 0.0
        %1630 = vmatpush.msra.mxu0 0.0
        %1631 = vmatpush.msra.mxu0 0.0
        %1632 = vmatpush.msra.mxu0 0.0
        %1633 = vmatpush.msra.mxu0 0.0
        %1634 = vmatpush.msra.mxu0 0.0
        %1635 = vmatpush.msra.mxu0 0.0
        %1636 = vmatpush.msra.mxu0 0.0
        %1637 = vmatpush.msra.mxu0 %v1549
        %1638 = vmatmul.f32.gmra.mxu0 %v1620
        %v1639 = vpop.f32.mrf.mxu0
        %v1640 = vadd.f32 0.0, %v1639
        %1641 = vdwg.mxu0
        %v1642 = vsel %vm448, %v1571, 0.0
        %v1643 = vsel %vm448, %v1594, 0.0
        %v1644 = vadd.f32 %v1642, %v1643
        %v1645 = vsel %vm448, %v1617, 0.0
        %v1646 = vadd.f32 %v1644, %v1645
        %v1647 = vsel %vm448, %v1640, 0.0
        %v1648 = vadd.f32 %v1646, %v1647
        %v1649 = vadd.f32 %v1107, %v1648
        %v1650 = vmul.f32 %v1649, %v1649
        %v1651 = vsel %vm448, %v1650, 0.0
        %1652 = vadd.xlane.f32.xlu0 %v1651
        %v1653 = vpop.xlane.xlu0 %1652
        %v1654 = vmul.f32 %v1653, %v458
        %v1655 = vadd.f32 %v1654, 1e-05
        %v1656 = vrsqrt.pop %v1655
        %v1657 = vmul.f32 %v1656, %v1655
        %v1658 = vmul.f32 %v1657, %v1656
        %v1659 = vmul.f32 0.5, %v1658
        %v1660 = vsub.f32 1.5, %v1659
        %v1661 = vmul.f32 %v1656, %v1660
        %vm1662 = vweird.f32 %v1655
        %vm1663 = vweird.f32 %v1656
        %vm1664 = vmor %vm1662, %vm1663
        %v1665 = vsel %vm1664, %v1656, %v1661
        %v1666 = vmul.f32 %v1649, %v1665
        %s1667 = scalar_lea.vmem %s6, 32
        %v1668 = vld [vmem:[%s1667] sm:$0xff]
        %v1669 = vld [vmem:[%s1667 + $0x8] sm:$0xff]
        %v1670 = vld [vmem:[%s1667 + $0x10] sm:$0xff]
        %v1671 = vld [vmem:[%s1667 + $0x18] sm:$0xff]
        %v1673 = vsel %vm448, %v1666, 0
        %1675 = vmatpush.msra.mxu0 0.0
        %1676 = vmatpush.msra.mxu0 0.0
        %1677 = vmatpush.msra.mxu0 0.0
        %1678 = vmatpush.msra.mxu0 0.0
        %1679 = vmatpush.msra.mxu0 0.0
        %1680 = vmatpush.msra.mxu0 0.0
        %1681 = vmatpush.msra.mxu0 0.0
        %1682 = vmatpush.msra.mxu0 0.0
        %1683 = vmatpush.msra.mxu0 0.0
        %1684 = vmatpush.msra.mxu0 0.0
        %1685 = vmatpush.msra.mxu0 0.0
        %1686 = vmatpush.msra.mxu0 0.0
        %1687 = vmatpush.msra.mxu0 %v1671
        %1688 = vmatpush.msra.mxu0 %v1670
        %1689 = vmatpush.msra.mxu0 %v1669
        %1690 = vmatpush.msra.mxu0 %v1668
        %1691 = vmatmul.f32.gmra.mxu0 %v1673
        %v1692 = vpop.f32.mrf.mxu0
        %v1693 = vadd.f32 0.0, %v1692
        %1694 = vdwg.mxu0
        %v1695 = vxor.u32 %v1693, 2147483648
        %v1696 = vmul.f32 %v1695, 1.442695
        %v1697 = vpow.pop %v1696
        %v1698 = vadd.f32 %v1697, 1.0
        %v1699 = vrcp.pop %v1698
        %v1700 = vmul.f32 %v1698, %v1699
        %v1701 = vsub.f32 1.0, %v1700
        %v1702 = vmul.f32 %v1699, %v1701
        %v1703 = vadd.f32 %v1699, %v1702
        %vm1704 = vweird.f32 %v1698
        %vm1705 = vweird.f32 %v1699
        %vm1706 = vmor %vm1704, %vm1705
        %v1707 = vsel %vm1706, %v1699, %v1703
        %v1708 = vand.u32 2147483647, %v1698
        %vm1709 = vcmp.eq.f32.partialorder %v1708, 8.507059e+37
        %v1710 = vand.u32 %v1698, 2147483648
        %v1711 = vor.u32 1.1754944e-38, %v1710
        %v1712 = vsel %vm1709, %v1711, %v1707
        %v1713 = vmul.f32 1.0, %v1712
        %v1714 = vmul.f32 %v1693, %v1713
        %1716 = vrot.lane.b32.xlu0 %v1693, 64
        %v1717 = vpop.permute.xlu0 %1716
        %v1719 = vmul.f32 %v1714, %v1717
        %s1720 = scalar_lea.vmem %s7, 64
        %v1721 = vld [vmem:[%s1720] sm:$0xff]
        %v1722 = vld [vmem:[%s1720 + $0x8] sm:$0xff]
        %v1723 = vld [vmem:[%s1720 + $0x10] sm:$0xff]
        %v1724 = vld [vmem:[%s1720 + $0x18] sm:$0xff]
        %v1725 = vld [vmem:[%s1720 + $0x20] sm:$0xff]
        %v1726 = vld [vmem:[%s1720 + $0x28] sm:$0xff]
        %v1727 = vld [vmem:[%s1720 + $0x30] sm:$0xff]
        %v1728 = vld [vmem:[%s1720 + $0x38] sm:$0xff]
        %v1730 = vsel %vm417, %v1719, 0
        %1732 = vmatpush.msra.mxu0 0.0
        %1733 = vmatpush.msra.mxu0 0.0
        %1734 = vmatpush.msra.mxu0 0.0
        %1735 = vmatpush.msra.mxu0 0.0
        %1736 = vmatpush.msra.mxu0 0.0
        %1737 = vmatpush.msra.mxu0 0.0
        %1738 = vmatpush.msra.mxu0 0.0
        %1739 = vmatpush.msra.mxu0 0.0
        %1740 = vmatpush.msra.mxu0 %v1728
        %1741 = vmatpush.msra.mxu0 %v1727
        %1742 = vmatpush.msra.mxu0 %v1726
        %1743 = vmatpush.msra.mxu0 %v1725
        %1744 = vmatpush.msra.mxu0 %v1724
        %1745 = vmatpush.msra.mxu0 %v1723
        %1746 = vmatpush.msra.mxu0 %v1722
        %1747 = vmatpush.msra.mxu0 %v1721
        %1748 = vmatmul.f32.gmra.mxu0 %v1730
        %v1749 = vpop.f32.mrf.mxu0
        %v1750 = vadd.f32 0.0, %v1749
        %1751 = vdwg.mxu0
        %v1752 = vadd.f32 %v1649, %v1750
        %v1753 = vmul.f32 %v1752, %v1752
        %v1754 = vsel %vm448, %v1753, 0.0
        %1755 = vadd.xlane.f32.xlu0 %v1754
        %v1756 = vpop.xlane.xlu0 %1755
        %v1757 = vmul.f32 %v1756, %v458
        %v1758 = vadd.f32 %v1757, 1e-05
        %v1759 = vrsqrt.pop %v1758
        %v1760 = vmul.f32 %v1759, %v1758
        %v1761 = vmul.f32 %v1760, %v1759
        %v1762 = vmul.f32 0.5, %v1761
        %v1763 = vsub.f32 1.5, %v1762
        %v1764 = vmul.f32 %v1759, %v1763
        %vm1765 = vweird.f32 %v1758
        %vm1766 = vweird.f32 %v1759
        %vm1767 = vmor %vm1765, %vm1766
        %v1768 = vsel %vm1767, %v1759, %v1764
        %v1769 = vmul.f32 %v1752, %v1768
        %v1770 = vld [vmem:[%s8] sm:$0xff]
        %v1771 = vld [vmem:[%s8 + $0x8] sm:$0xff]
        %v1772 = vld [vmem:[%s8 + $0x10] sm:$0xff]
        %v1773 = vld [vmem:[%s8 + $0x18] sm:$0xff]
        %v1775 = vsel %vm448, %v1769, 0
        %1777 = vmatpush.msra.mxu0 0.0
        %1778 = vmatpush.msra.mxu0 0.0
        %1779 = vmatpush.msra.mxu0 0.0
        %1780 = vmatpush.msra.mxu0 0.0
        %1781 = vmatpush.msra.mxu0 0.0
        %1782 = vmatpush.msra.mxu0 0.0
        %1783 = vmatpush.msra.mxu0 0.0
        %1784 = vmatpush.msra.mxu0 0.0
        %1785 = vmatpush.msra.mxu0 0.0
        %1786 = vmatpush.msra.mxu0 0.0
        %1787 = vmatpush.msra.mxu0 0.0
        %1788 = vmatpush.msra.mxu0 0.0
        %1789 = vmatpush.msra.mxu0 %v1773
        %1790 = vmatpush.msra.mxu0 %v1772
        %1791 = vmatpush.msra.mxu0 %v1771
        %1792 = vmatpush.msra.mxu0 %v1770
        %1793 = vmatmul.f32.gmra.mxu0 %v1775
        %v1794 = vpop.f32.mrf.mxu0
        %v1795 = vadd.f32 0.0, %v1794
        %1796 = vdwg.mxu0
        %1797 = vst [vmem:[%s338] sm:$0xff] %v1795
        %s1798 = sand.u32 %s226, 1
        %s1799 = scalar_lea.sflag [#allocation4], %s1798
        %s1800 = sand.u32 %s226, 1
        %s1801 = smul.addr %s1800, 8
        %s1802 = scalar_lea.vmem [#allocation5], %s1801
        // Predicated region
        $region61: #{tpu_custom_call.1} parent=55 // pred_check
          %p1803 = pneg %p236
        $region62: #{tpu_custom_call.1} parent=55 // pred_check_branch
          %1805 = sbr.rel (%p1803) target = $region64
        $region63: #{tpu_custom_call.1} parent=55 // pred_region
          %1807 = vsyncadd %s1799, 0
          %s1808 = smul.addr %s24, 8
          %s1809 = scalar_lea.hbm %s9, %s1808
          %s1811 = sshll.u32 %s1802, 4
          %s1812 = int_to_ptr.vmem [resolvable:$true] %s1811
          %s1813 = sshll.u32 %s1809, 4
          %s1814 = int_to_ptr.hbm [resolvable:$true] %s1813
          %1816 = dma.vmem_to_hbm [thread:$0]  %s1812, 128, %s1814, %s1799
        $region64: #{tpu_custom_call.1} parent=55 // pred_fallthru
          _
      $region56: #{tpu_custom_call.1} parent=5 // pred_fallthru
        _
      %p1817 = scmp.le.s32.totalorder 2, %s19
      // Predicated region
      $region65: #{tpu_custom_call.1} parent=5 // pred_check
        %p1818 = pneg %p1817
      $region66: #{tpu_custom_call.1} parent=5 // pred_check_branch
        %1820 = sbr.rel (%p1818) target = $region68
      $region67: #{tpu_custom_call.1} parent=5 // pred_region
        %s1821 = ssub.s32 %s19, 2
        // Predicated region
        $region69: #{tpu_custom_call.1} parent=67 // pred_check
          %p1822 = pneg %p242
        $region70: #{tpu_custom_call.1} parent=67 // pred_check_branch
          %1824 = sbr.rel (%p1822) target = $region72
        $region71: #{tpu_custom_call.1} parent=67 // pred_region
          %s1825 = sand.u32 %s227, 1
          %s1826 = scalar_lea.sflag [#allocation4], %s1825
          %s1827 = sand.u32 %s227, 1
          %s1828 = smul.addr %s1827, 8
          %s1829 = scalar_lea.vmem [#allocation5], %s1828
          %1831 = dma.done %s1826, 128
        $region72: #{tpu_custom_call.1} parent=67 // pred_fallthru
          _
      $region68: #{tpu_custom_call.1} parent=5 // pred_fallthru
        _
    $region6: #{tpu_custom_call.1} parent=1 // loop_footer
      %s23 = sadd.s32 1, %s19
    $region7: #{tpu_custom_call.1} parent=1 // loop_footer_branch
      %18 = sbr.rel target = $region3
    $region8: #{tpu_custom_call.1} parent=1 // loop_exit
      _
    %1832 = vsyncpa [#allocation3], 1
    %s1833 = scalar_lea.sflag [#allocation3], 1
    %1834 = vsyncpa %s1833, 1
    %1835 = vsyncpa [#allocation4], 1
    %s1836 = scalar_lea.sflag [#allocation4], 1
    %1837 = vsyncpa %s1836, 1

</llo_original>
